<compile_context>
chip_gen: v7x
topology: tpu7x:2x2x1
jax: 0.10.0
libtpu: 0.0.40
codegen_flags: <defaults>
</compile_context>

<pallas_src>
import numpy as np

import jax
import jax.numpy as jnp
from jax.experimental import pallas as pl
from jax.experimental.pallas import tpu as pltpu

# ---------------------------------------------------------------------------
# Small self-consistent config (shrunk for a synthetic kernel).
# ---------------------------------------------------------------------------
NUM_CLASSES = 8
NUM_CHANNELS = 4      # == CONV1_OUT so the module's BatchNorm2d(num_channels) is valid
CONV1_OUT = 4
CONV2_OUT = 8
CONV3_OUT = 16
IMG_DIM = 16
FC1_OUT = 32
FC2_OUT = 32
BATCH = 2
BN_EPS = 1e-5

# ---------------------------------------------------------------------------
# Flattened zero-padded-grid geometry (Python ints, all static).
# ---------------------------------------------------------------------------
H1P = IMG_DIM + 2                 # 18  conv1 padded grid
O1 = IMG_DIM + 1                  # 17  conv1 output spatial
F1 = H1P * H1P                    # 324
L1 = (O1 - 1) * H1P + O1          # 305 conv1 output window (covers all anchors)

H2P = O1 + 2                      # 19  conv2 padded grid
O2 = O1 + 1                       # 18  conv2 output spatial
F2 = H2P * H2P                    # 361
L2 = (O2 - 1) * H2P + O2          # 341
P2 = O2 // 2                      # 9   maxpool output spatial
M2W = 2 * (P2 - 1) * (H2P + 1) + 1   # 321 maxpool anchor window

H3P = P2 + 2                      # 11  conv3 padded grid
O3 = P2 + 1                       # 10  conv3 output spatial
F3 = H3P * H3P                    # 121
L3 = (O3 - 1) * H3P + O3          # 109
P3 = O3 // 2                      # 5   avgpool output spatial
S2W = 2 * (P3 - 1) * (H3P + 1) + 1   # 97  avgpool anchor window

W1 = (BATCH - 1) * F1 + L1        # 629 lane-batched conv1 output width
W2 = (BATCH - 1) * F2 + L2        # 702 lane-batched conv2 output width
W3 = (BATCH - 1) * F3 + L3        # 230 lane-batched conv3 output width

FC1_IN = CONV3_OUT * P3 * P3      # 400
BLK = CONV3_OUT * FC1_OUT         # 512

SHIFTS1 = (0, 1, H1P, H1P + 1)
SHIFTS2 = (0, 1, H2P, H2P + 1)
SHIFTS3 = (0, 1, H3P, H3P + 1)

BN_COUNT = float(BATCH * O1 * O1)  # 578 valid positions for BatchNorm statistics

# Every shifted tap slice / per-image window must stay inside its grid.
assert L1 + H1P + 1 <= F1
assert L2 + H2P + 1 <= F2
assert L3 + H3P + 1 <= F3
assert (BATCH - 1) * F2 + M2W <= W2 - H2P - 1
assert (BATCH - 1) * F3 + S2W <= W3 - H3P - 1


def _constants():
    """Constant matrices: selection/re-embedding, masks, fc1 block-diag helpers."""
    # conv1 output (17x17, row stride 18) -> interior of conv2 padded grid (19x19)
    sel1 = np.zeros((L1, F2), np.float32)
    for r in range(O1):
        for c in range(O1):
            sel1[r * H1P + c, (r + 1) * H2P + (c + 1)] = 1.0
    # maxpool anchors (stride 2 on 18x18, row stride 19) -> interior of conv3 grid (11x11)
    selmax = np.zeros((M2W, F3), np.float32)
    for r in range(P2):
        for c in range(P2):
            selmax[2 * r * H2P + 2 * c, (r + 1) * H3P + (c + 1)] = 1.0
    # avgpool anchors (stride 2 on 10x10, row stride 11) -> flat r*5+c, 0.25 folded in
    selavg = np.zeros((S2W, P3 * P3), np.float32)
    for r in range(P3):
        for c in range(P3):
            selavg[2 * r * H3P + 2 * c, r * P3 + c] = 0.25
    # valid conv1-output anchors in the lane-batched width (for BN statistics)
    vmask = np.zeros((1, W1), np.float32)
    for n in range(BATCH):
        for r in range(O1):
            for c in range(O1):
                vmask[0, n * F1 + r * H1P + c] = 1.0
    # fc1 block-diagonal mask: keep row-channel == weight-slab channel
    diag = np.zeros((BATCH * CONV3_OUT, BLK), np.float32)
    for n in range(BATCH):
        for co in range(CONV3_OUT):
            diag[n * CONV3_OUT + co, co * FC1_OUT:(co + 1) * FC1_OUT] = 1.0
    # fold the C3 lane bands (co*FC1_OUT + o) down to FC1_OUT lanes
    fold = np.zeros((BLK, FC1_OUT), np.float32)
    for co in range(CONV3_OUT):
        fold[co * FC1_OUT:(co + 1) * FC1_OUT, :] = np.eye(FC1_OUT, dtype=np.float32)
    return sel1, selmax, selavg, vmask, diag, fold


_SEL1_NP, _SELMAX_NP, _SELAVG_NP, _VMASK_NP, _DIAG_NP, _FOLD_NP = _constants()

_VMEM = pl.BlockSpec(memory_space=pltpu.MemorySpace.VMEM)


# ---------------------------------------------------------------------------
# The fused kernel.
# ---------------------------------------------------------------------------
def _charmanet_kernel(x1t_ref, vmask_ref, sel1_ref, selmax_ref, selavg_ref,
                      w1_ref, b1_ref, gamma_ref, beta_ref,
                      w2_ref, b2_ref, w3_ref, b3_ref,
                      wblk_ref, diag_ref, fold_ref, bf1_ref,
                      wf2_ref, bf2_ref, wf3_ref, bf3_ref,
                      out_ref):
    f32 = jnp.float32

    def mm(a, b):
        return jnp.dot(a, b, preferred_element_type=f32)

    def elu(v):
        # exp argument clamped to <= 0 so no inf intermediates (alpha = 1).
        return jnp.where(v > 0.0, v, jnp.exp(jnp.minimum(v, 0.0)) - 1.0)

    def stack_taps(x, shifts, width):
        # 2x2/stride-1 conv as ONE matmul: the 4 shifted slices are stacked
        # along the contraction (sublane) axis.
        return jnp.concatenate([x[:, s:s + width] for s in shifts], axis=0)

    def stack_images(x, stride, width):
        # lane-batched (C, ...) -> sublane-stacked (B*C, width) for the
        # selection matmuls (shared RHS, one matmul for the whole batch).
        return jnp.concatenate(
            [x[:, n * stride:n * stride + width] for n in range(BATCH)], axis=0)

    def unstack_images(x, c):
        # sublane-stacked (B*C, F) -> lane-batched (C, B*F) for the next conv.
        return jnp.concatenate([x[n * c:(n + 1) * c, :] for n in range(BATCH)], axis=1)

    # Selection constants are DMA'd as bf16 (exact 0/1 and 0.25), widened once.
    sel1 = sel1_ref[...].astype(f32)
    selmax = selmax_ref[...].astype(f32)
    selavg = selavg_ref[...].astype(f32)

    # ---- conv1 + ELU (batch folded into lanes; taps pre-stacked in wrapper).
    y1 = elu(mm(w1_ref[...], x1t_ref[...]) + b1_ref[...])                # (C1, W1)

    # ---- BatchNorm2d: training-mode batch stats (biased var) over the valid
    #      anchors only, via a constant 0/1 mask -> no extra projection matmul.
    ym = y1 * vmask_ref[...]
    mean = jnp.sum(ym, axis=1, keepdims=True) * (1.0 / BN_COUNT)         # (C1, 1)
    var = jnp.sum(ym * y1, axis=1, keepdims=True) * (1.0 / BN_COUNT) - mean * mean
    inv = jax.lax.rsqrt(var + BN_EPS)
    scale = gamma_ref[...] * inv
    shift = beta_ref[...] - mean * scale
    y1n = y1 * scale + shift                                             # (C1, W1)

    # ---- single sel1 projection onto the conv2 zero-padded grids
    #      (both images stacked along sublanes -> one (B*C1, L1)@(L1, F2)).
    x2 = unstack_images(mm(stack_images(y1n, F1, L1), sel1), CONV1_OUT)  # (C1, B*F2)

    # ---- conv2 + ELU (one fused-tap matmul for the whole batch).
    y2 = elu(mm(w2_ref[...], stack_taps(x2, SHIFTS2, W2)) + b2_ref[...])  # (C2, W2)

    # ---- maxpool 2x2/2: shifted max passes + one selection matmul that also
    #      re-embeds the anchors into the conv3 zero-padded grids.
    mv = jnp.maximum(y2[:, :W2 - H2P], y2[:, H2P:])
    m2 = jnp.maximum(mv[:, :W2 - H2P - 1], mv[:, 1:])
    x3 = unstack_images(mm(stack_images(m2, F2, M2W), selmax), CONV2_OUT)  # (C2, B*F3)

    # ---- conv3 + ELU.
    y3 = elu(mm(w3_ref[...], stack_taps(x3, SHIFTS3, W3)) + b3_ref[...])  # (C3, W3)

    # ---- avgpool 2x2/2 (the 0.25 factor is folded into selavg).
    sv = y3[:, :W3 - H3P] + y3[:, H3P:]
    s2 = sv[:, :W3 - H3P - 1] + sv[:, 1:]
    pooled = mm(stack_images(s2, F3, S2W), selavg)                       # (B*C3, 25)

    # ---- fc1 with the torch NCHW flatten, without the 16-matmul channel loop:
    #      contrib[b*C3+c, c'*O+o] = sum_k pooled[b*C3+c, k] * Wfc1[c'*25+k, o];
    #      the 0/1 diag mask keeps c' == c, the per-image sublane sum collapses
    #      the channel axis, and the fold matmul adds the C3 lane bands.
    contrib = mm(pooled, wblk_ref[...]) * diag_ref[...]                  # (B*C3, C3*FC1_OUT)
    rows = jnp.concatenate(
        [jnp.sum(contrib[n * CONV3_OUT:(n + 1) * CONV3_OUT, :], axis=0, keepdims=True)
         for n in range(BATCH)], axis=0)                                 # (B, C3*FC1_OUT)
    f1 = jnp.maximum(mm(rows, fold_ref[...]) + bf1_ref[...], 0.0)        # (B, FC1_OUT)
    # TODO(synk): nn.Dropout(p=0.5) is stochastic in train mode; identity here (eval).

    # ---- batched fc2 + ReLU, fc3 + softmax(dim=1), single store.
    f2 = jnp.maximum(mm(f1, wf2_ref[...]) + bf2_ref[...], 0.0)           # (B, FC2_OUT)
    logits = mm(f2, wf3_ref[...]) + bf3_ref[...]                         # (B, 8)
    m = jnp.max(logits, axis=-1, keepdims=True)
    e = jnp.exp(logits - m)
    out_ref[...] = e / jnp.sum(e, axis=-1, keepdims=True)


# ---------------------------------------------------------------------------
# Wrapper: one-time layout plumbing of inputs/parameters, then one pallas_call.
# ---------------------------------------------------------------------------
def charmanet_forward(x_nchw, p):
    assert x_nchw.shape == (BATCH, NUM_CHANNELS, IMG_DIM, IMG_DIM)
    f32 = jnp.float32

    # Zero-pad (conv1 padding=1), flatten each grid row-major, concatenate the
    # batch along the lane axis and pre-stack the 4 conv1 taps (wrapper-side).
    x_pad = jnp.pad(x_nchw.astype(f32), ((0, 0), (0, 0), (1, 1), (1, 1)))
    x_cat = jnp.transpose(x_pad.reshape(BATCH, NUM_CHANNELS, F1),
                          (1, 0, 2)).reshape(NUM_CHANNELS, BATCH * F1)    # (Cin, B*F1)
    x1t = jnp.concatenate([x_cat[:, s:s + W1] for s in SHIFTS1], axis=0)  # (4*Cin, W1)

    def fuse_conv_w(w):   # HWIO (2,2,Cin,Cout) -> (Cout, 4*Cin), tap-major rows
        kh, kw, ci, co = w.shape
        return jnp.transpose(w, (3, 0, 1, 2)).reshape(co, kh * kw * ci)

    w1f = fuse_conv_w(p["w1"]); b1 = p["b1"].reshape(-1, 1)
    w2f = fuse_conv_w(p["w2"]); b2 = p["b2"].reshape(-1, 1)
    w3f = fuse_conv_w(p["w3"]); b3 = p["b3"].reshape(-1, 1)
    gamma = p["gamma"].reshape(-1, 1)
    beta = p["beta"].reshape(-1, 1)

    # fc1 weight (FC1_IN, FC1_OUT) in torch NCHW flatten order -> block layout
    # (25, C3*FC1_OUT) used by the in-kernel block-diagonal contraction.
    wblk = jnp.transpose(p["wfc1"].reshape(CONV3_OUT, P3 * P3, FC1_OUT),
                         (1, 0, 2)).reshape(P3 * P3, BLK)
    bf1 = p["bfc1"].reshape(1, -1)
    wf2 = p["wfc2"]; bf2 = p["bfc2"].reshape(1, -1)
    wf3 = p["wfc3"]; bf3 = p["bfc3"].reshape(1, -1)

    # 0/1 (and 0.25) constants are exact in bf16 -> half the constant DMA.
    sel1 = jnp.asarray(_SEL1_NP, jnp.bfloat16)
    selmax = jnp.asarray(_SELMAX_NP, jnp.bfloat16)
    selavg = jnp.asarray(_SELAVG_NP, jnp.bfloat16)
    vmask = jnp.asarray(_VMASK_NP)
    diagm = jnp.asarray(_DIAG_NP)
    foldm = jnp.asarray(_FOLD_NP)

    return pl.pallas_call(
        _charmanet_kernel,
        out_shape=jax.ShapeDtypeStruct((BATCH, NUM_CLASSES), jnp.float32),
        in_specs=[_VMEM] * 21,
        out_specs=_VMEM,
        cost_estimate=pl.CostEstimate(flops=4_600_000, transcendentals=12_000,
                                      bytes_accessed=550_000),
    )(x1t, vmask, sel1, selmax, selavg,
      w1f, b1, gamma, beta, w2f, b2, w3f, b3,
      wblk, diagm, foldm, bf1, wf2, bf2, wf3, bf3)


# ---------------------------------------------------------------------------
# Parameter init (torch-like uniform bounds; BN affine gamma=1, beta=0).
# ---------------------------------------------------------------------------
def _uniform(key, shape, bound):
    return jax.random.uniform(key, shape, jnp.float32, -bound, bound)


def init_params(key):
    ks = jax.random.split(key, 12)
    p = {}

    def conv(kw_, kb_, cin, cout):
        bound = 1.0 / float(np.sqrt(cin * 2.0 * 2.0))
        return _uniform(kw_, (2, 2, cin, cout), bound), _uniform(kb_, (cout,), bound)

    def fc(kw_, kb_, fin, fout):
        bound = 1.0 / float(np.sqrt(fin))
        return _uniform(kw_, (fin, fout), bound), _uniform(kb_, (fout,), bound)

    p["w1"], p["b1"] = conv(ks[0], ks[1], NUM_CHANNELS, CONV1_OUT)
    p["w2"], p["b2"] = conv(ks[2], ks[3], CONV1_OUT, CONV2_OUT)
    p["w3"], p["b3"] = conv(ks[4], ks[5], CONV2_OUT, CONV3_OUT)
    p["gamma"] = jnp.ones((NUM_CHANNELS,), jnp.float32)
    p["beta"] = jnp.zeros((NUM_CHANNELS,), jnp.float32)
    p["wfc1"], p["bfc1"] = fc(ks[6], ks[7], FC1_IN, FC1_OUT)
    p["wfc2"], p["bfc2"] = fc(ks[8], ks[9], FC1_OUT, FC2_OUT)
    p["wfc3"], p["bfc3"] = fc(ks[10], ks[11], FC2_OUT, NUM_CLASSES)
    return p


if __name__ == "__main__":
    key = jax.random.PRNGKey(0)
    k_x, k_p = jax.random.split(key)
    x = jax.random.normal(k_x, (BATCH, NUM_CHANNELS, IMG_DIM, IMG_DIM), jnp.float32)  # NCHW
    params = init_params(k_p)

    out = jax.jit(charmanet_forward)(x, params)
    out = jax.block_until_ready(out)

    assert out.shape == (BATCH, NUM_CLASSES), out.shape
    assert bool(jnp.all(jnp.isfinite(out)))
    # softmax rows must sum to 1
    assert jnp.allclose(jnp.sum(out, axis=1), 1.0, atol=1e-5)
    print("KERNEL_OK")
</pallas_src>

<mosaic_0001>
module attributes {stable_mosaic.version = 11 : i64} {
  func.func @_charmanet_kernel(%arg0: memref<16x629xf32, #tpu.memory_space<vmem>>, %arg1: memref<1x629xf32, #tpu.memory_space<vmem>>, %arg2: memref<305x361xbf16, #tpu.memory_space<vmem>>, %arg3: memref<321x121xbf16, #tpu.memory_space<vmem>>, %arg4: memref<97x25xbf16, #tpu.memory_space<vmem>>, %arg5: memref<4x16xf32, #tpu.memory_space<vmem>>, %arg6: memref<4x1xf32, #tpu.memory_space<vmem>>, %arg7: memref<4x1xf32, #tpu.memory_space<vmem>>, %arg8: memref<4x1xf32, #tpu.memory_space<vmem>>, %arg9: memref<8x16xf32, #tpu.memory_space<vmem>>, %arg10: memref<8x1xf32, #tpu.memory_space<vmem>>, %arg11: memref<16x32xf32, #tpu.memory_space<vmem>>, %arg12: memref<16x1xf32, #tpu.memory_space<vmem>>, %arg13: memref<25x512xf32, #tpu.memory_space<vmem>>, %arg14: memref<32x512xf32, #tpu.memory_space<vmem>>, %arg15: memref<512x32xf32, #tpu.memory_space<vmem>>, %arg16: memref<1x32xf32, #tpu.memory_space<vmem>>, %arg17: memref<32x32xf32, #tpu.memory_space<vmem>>, %arg18: memref<1x32xf32, #tpu.memory_space<vmem>>, %arg19: memref<32x8xf32, #tpu.memory_space<vmem>>, %arg20: memref<1x8xf32, #tpu.memory_space<vmem>>, %arg21: memref<2x8xf32, #tpu.memory_space<vmem>>) attributes {dimension_semantics = [], scalar_prefetch = 0 : i64, scratch_operands = 0 : i64, tpu.core_type = #tpu.core_type<tc>} {
    %c0 = arith.constant 0 : index
    %c0_0 = arith.constant 0 : index
    %0 = vector.load %arg2[%c0, %c0_0] : memref<305x361xbf16, #tpu.memory_space<vmem>>, vector<305x361xbf16>
    %1 = arith.extf %0 : vector<305x361xbf16> to vector<305x361xf32>
    %c0_1 = arith.constant 0 : index
    %c0_2 = arith.constant 0 : index
    %2 = vector.load %arg3[%c0_1, %c0_2] : memref<321x121xbf16, #tpu.memory_space<vmem>>, vector<321x121xbf16>
    %3 = arith.extf %2 : vector<321x121xbf16> to vector<321x121xf32>
    %c0_3 = arith.constant 0 : index
    %c0_4 = arith.constant 0 : index
    %4 = vector.load %arg4[%c0_3, %c0_4] : memref<97x25xbf16, #tpu.memory_space<vmem>>, vector<97x25xbf16>
    %5 = arith.extf %4 : vector<97x25xbf16> to vector<97x25xf32>
    %c0_5 = arith.constant 0 : index
    %c0_6 = arith.constant 0 : index
    %6 = vector.load %arg5[%c0_5, %c0_6] : memref<4x16xf32, #tpu.memory_space<vmem>>, vector<4x16xf32>
    %c0_7 = arith.constant 0 : index
    %c0_8 = arith.constant 0 : index
    %7 = vector.load %arg0[%c0_7, %c0_8] : memref<16x629xf32, #tpu.memory_space<vmem>>, vector<16x629xf32>
    %cst = arith.constant dense<0.000000e+00> : vector<4x629xf32>
    %8 = tpu.matmul %6, %7, %cst {dimension_numbers = #tpu.dot_dimension_numbers<[1], [0], [0], [1], [0, 0, 1, 1], [], []>} : vector<4x16xf32>, vector<16x629xf32>, vector<4x629xf32> -> vector<4x629xf32>
    %c0_9 = arith.constant 0 : index
    %c0_10 = arith.constant 0 : index
    %9 = vector.load %arg6[%c0_9, %c0_10] : memref<4x1xf32, #tpu.memory_space<vmem>>, vector<4x1xf32>
    %10 = vector.broadcast %9 : vector<4x1xf32> to vector<4x629xf32>
    %11 = arith.addf %8, %10 : vector<4x629xf32>
    %cst_11 = arith.constant 0.000000e+00 : f32
    %12 = vector.broadcast %cst_11 : f32 to vector<4x629xf32>
    %13 = arith.cmpf ogt, %11, %12 : vector<4x629xf32>
    %cst_12 = arith.constant 0.000000e+00 : f32
    %14 = vector.broadcast %cst_12 : f32 to vector<4x629xf32>
    %15 = arith.minimumf %11, %14 : vector<4x629xf32>
    %16 = math.exp %15 : vector<4x629xf32>
    %cst_13 = arith.constant 1.000000e+00 : f32
    %17 = vector.broadcast %cst_13 : f32 to vector<4x629xf32>
    %18 = arith.subf %16, %17 : vector<4x629xf32>
    %19 = arith.select %13, %11, %18 : vector<4x629xi1>, vector<4x629xf32>
    %c0_14 = arith.constant 0 : index
    %c0_15 = arith.constant 0 : index
    %20 = vector.load %arg1[%c0_14, %c0_15] : memref<1x629xf32, #tpu.memory_space<vmem>>, vector<1x629xf32>
    %21 = vector.broadcast %20 : vector<1x629xf32> to vector<4x629xf32>
    %22 = arith.mulf %19, %21 : vector<4x629xf32>
    %cst_16 = arith.constant dense<0.000000e+00> : vector<4xf32>
    %23 = vector.multi_reduction <add>, %22, %cst_16 [1] : vector<4x629xf32> to vector<4xf32>
    %24 = vector.shape_cast %23 : vector<4xf32> to vector<4x1xf32>
    %cst_17 = arith.constant 0.00173010386 : f32
    %25 = vector.broadcast %cst_17 : f32 to vector<4x1xf32>
    %26 = arith.mulf %24, %25 : vector<4x1xf32>
    %27 = arith.mulf %22, %19 : vector<4x629xf32>
    %cst_18 = arith.constant dense<0.000000e+00> : vector<4xf32>
    %28 = vector.multi_reduction <add>, %27, %cst_18 [1] : vector<4x629xf32> to vector<4xf32>
    %29 = vector.shape_cast %28 : vector<4xf32> to vector<4x1xf32>
    %cst_19 = arith.constant 0.00173010386 : f32
    %30 = vector.broadcast %cst_19 : f32 to vector<4x1xf32>
    %31 = arith.mulf %29, %30 : vector<4x1xf32>
    %32 = arith.mulf %26, %26 : vector<4x1xf32>
    %33 = arith.subf %31, %32 : vector<4x1xf32>
    %cst_20 = arith.constant 9.99999974E-6 : f32
    %34 = vector.broadcast %cst_20 : f32 to vector<4x1xf32>
    %35 = arith.addf %33, %34 : vector<4x1xf32>
    %36 = math.rsqrt %35 : vector<4x1xf32>
    %c0_21 = arith.constant 0 : index
    %c0_22 = arith.constant 0 : index
    %37 = vector.load %arg7[%c0_21, %c0_22] : memref<4x1xf32, #tpu.memory_space<vmem>>, vector<4x1xf32>
    %38 = arith.mulf %37, %36 : vector<4x1xf32>
    %c0_23 = arith.constant 0 : index
    %c0_24 = arith.constant 0 : index
    %39 = vector.load %arg8[%c0_23, %c0_24] : memref<4x1xf32, #tpu.memory_space<vmem>>, vector<4x1xf32>
    %40 = arith.mulf %26, %38 : vector<4x1xf32>
    %41 = arith.subf %39, %40 : vector<4x1xf32>
    %42 = vector.broadcast %38 : vector<4x1xf32> to vector<4x629xf32>
    %43 = arith.mulf %19, %42 : vector<4x629xf32>
    %44 = vector.broadcast %41 : vector<4x1xf32> to vector<4x629xf32>
    %45 = arith.addf %43, %44 : vector<4x629xf32>
    %46 = vector.extract_strided_slice %45 {offsets = [0, 0], sizes = [4, 305], strides = [1, 1]} : vector<4x629xf32> to vector<4x305xf32>
    %47 = vector.extract_strided_slice %45 {offsets = [0, 324], sizes = [4, 305], strides = [1, 1]} : vector<4x629xf32> to vector<4x305xf32>
    %48 = tpu.concatenate %46, %47 in 0 : vector<4x305xf32>, vector<4x305xf32> -> vector<8x305xf32>
    %cst_25 = arith.constant dense<0.000000e+00> : vector<8x361xf32>
    %49 = tpu.matmul %48, %1, %cst_25 {dimension_numbers = #tpu.dot_dimension_numbers<[1], [0], [0], [1], [0, 0, 1, 1], [], []>} : vector<8x305xf32>, vector<305x361xf32>, vector<8x361xf32> -> vector<8x361xf32>
    %50 = vector.extract_strided_slice %49 {offsets = [0, 0], sizes = [4, 361], strides = [1, 1]} : vector<8x361xf32> to vector<4x361xf32>
    %51 = vector.extract_strided_slice %49 {offsets = [4, 0], sizes = [4, 361], strides = [1, 1]} : vector<8x361xf32> to vector<4x361xf32>
    %52 = tpu.concatenate %50, %51 in 1 : vector<4x361xf32>, vector<4x361xf32> -> vector<4x722xf32>
    %c0_26 = arith.constant 0 : index
    %c0_27 = arith.constant 0 : index
    %53 = vector.load %arg9[%c0_26, %c0_27] : memref<8x16xf32, #tpu.memory_space<vmem>>, vector<8x16xf32>
    %54 = vector.extract_strided_slice %52 {offsets = [0, 0], sizes = [4, 702], strides = [1, 1]} : vector<4x722xf32> to vector<4x702xf32>
    %55 = vector.extract_strided_slice %52 {offsets = [0, 1], sizes = [4, 702], strides = [1, 1]} : vector<4x722xf32> to vector<4x702xf32>
    %56 = vector.extract_strided_slice %52 {offsets = [0, 19], sizes = [4, 702], strides = [1, 1]} : vector<4x722xf32> to vector<4x702xf32>
    %57 = vector.extract_strided_slice %52 {offsets = [0, 20], sizes = [4, 702], strides = [1, 1]} : vector<4x722xf32> to vector<4x702xf32>
    %58 = tpu.concatenate %54, %55, %56, %57 in 0 : vector<4x702xf32>, vector<4x702xf32>, vector<4x702xf32>, vector<4x702xf32> -> vector<16x702xf32>
    %cst_28 = arith.constant dense<0.000000e+00> : vector<8x702xf32>
    %59 = tpu.matmul %53, %58, %cst_28 {dimension_numbers = #tpu.dot_dimension_numbers<[1], [0], [0], [1], [0, 0, 1, 1], [], []>} : vector<8x16xf32>, vector<16x702xf32>, vector<8x702xf32> -> vector<8x702xf32>
    %c0_29 = arith.constant 0 : index
    %c0_30 = arith.constant 0 : index
    %60 = vector.load %arg10[%c0_29, %c0_30] : memref<8x1xf32, #tpu.memory_space<vmem>>, vector<8x1xf32>
    %61 = vector.broadcast %60 : vector<8x1xf32> to vector<8x702xf32>
    %62 = arith.addf %59, %61 : vector<8x702xf32>
    %cst_31 = arith.constant 0.000000e+00 : f32
    %63 = vector.broadcast %cst_31 : f32 to vector<8x702xf32>
    %64 = arith.cmpf ogt, %62, %63 : vector<8x702xf32>
    %cst_32 = arith.constant 0.000000e+00 : f32
    %65 = vector.broadcast %cst_32 : f32 to vector<8x702xf32>
    %66 = arith.minimumf %62, %65 : vector<8x702xf32>
    %67 = math.exp %66 : vector<8x702xf32>
    %cst_33 = arith.constant 1.000000e+00 : f32
    %68 = vector.broadcast %cst_33 : f32 to vector<8x702xf32>
    %69 = arith.subf %67, %68 : vector<8x702xf32>
    %70 = arith.select %64, %62, %69 : vector<8x702xi1>, vector<8x702xf32>
    %71 = vector.extract_strided_slice %70 {offsets = [0, 0], sizes = [8, 683], strides = [1, 1]} : vector<8x702xf32> to vector<8x683xf32>
    %72 = vector.extract_strided_slice %70 {offsets = [0, 19], sizes = [8, 683], strides = [1, 1]} : vector<8x702xf32> to vector<8x683xf32>
    %73 = arith.maximumf %71, %72 : vector<8x683xf32>
    %74 = vector.extract_strided_slice %73 {offsets = [0, 0], sizes = [8, 682], strides = [1, 1]} : vector<8x683xf32> to vector<8x682xf32>
    %75 = vector.extract_strided_slice %73 {offsets = [0, 1], sizes = [8, 682], strides = [1, 1]} : vector<8x683xf32> to vector<8x682xf32>
    %76 = arith.maximumf %74, %75 : vector<8x682xf32>
    %77 = vector.extract_strided_slice %76 {offsets = [0, 0], sizes = [8, 321], strides = [1, 1]} : vector<8x682xf32> to vector<8x321xf32>
    %78 = vector.extract_strided_slice %76 {offsets = [0, 361], sizes = [8, 321], strides = [1, 1]} : vector<8x682xf32> to vector<8x321xf32>
    %79 = tpu.concatenate %77, %78 in 0 : vector<8x321xf32>, vector<8x321xf32> -> vector<16x321xf32>
    %cst_34 = arith.constant dense<0.000000e+00> : vector<16x121xf32>
    %80 = tpu.matmul %79, %3, %cst_34 {dimension_numbers = #tpu.dot_dimension_numbers<[1], [0], [0], [1], [0, 0, 1, 1], [], []>} : vector<16x321xf32>, vector<321x121xf32>, vector<16x121xf32> -> vector<16x121xf32>
    %81 = vector.extract_strided_slice %80 {offsets = [0, 0], sizes = [8, 121], strides = [1, 1]} : vector<16x121xf32> to vector<8x121xf32>
    %82 = vector.extract_strided_slice %80 {offsets = [8, 0], sizes = [8, 121], strides = [1, 1]} : vector<16x121xf32> to vector<8x121xf32>
    %83 = tpu.concatenate %81, %82 in 1 : vector<8x121xf32>, vector<8x121xf32> -> vector<8x242xf32>
    %c0_35 = arith.constant 0 : index
    %c0_36 = arith.constant 0 : index
    %84 = vector.load %arg11[%c0_35, %c0_36] : memref<16x32xf32, #tpu.memory_space<vmem>>, vector<16x32xf32>
    %85 = vector.extract_strided_slice %83 {offsets = [0, 0], sizes = [8, 230], strides = [1, 1]} : vector<8x242xf32> to vector<8x230xf32>
    %86 = vector.extract_strided_slice %83 {offsets = [0, 1], sizes = [8, 230], strides = [1, 1]} : vector<8x242xf32> to vector<8x230xf32>
    %87 = vector.extract_strided_slice %83 {offsets = [0, 11], sizes = [8, 230], strides = [1, 1]} : vector<8x242xf32> to vector<8x230xf32>
    %88 = vector.extract_strided_slice %83 {offsets = [0, 12], sizes = [8, 230], strides = [1, 1]} : vector<8x242xf32> to vector<8x230xf32>
    %89 = tpu.concatenate %85, %86, %87, %88 in 0 : vector<8x230xf32>, vector<8x230xf32>, vector<8x230xf32>, vector<8x230xf32> -> vector<32x230xf32>
    %cst_37 = arith.constant dense<0.000000e+00> : vector<16x230xf32>
    %90 = tpu.matmul %84, %89, %cst_37 {dimension_numbers = #tpu.dot_dimension_numbers<[1], [0], [0], [1], [0, 0, 1, 1], [], []>} : vector<16x32xf32>, vector<32x230xf32>, vector<16x230xf32> -> vector<16x230xf32>
    %c0_38 = arith.constant 0 : index
    %c0_39 = arith.constant 0 : index
    %91 = vector.load %arg12[%c0_38, %c0_39] : memref<16x1xf32, #tpu.memory_space<vmem>>, vector<16x1xf32>
    %92 = vector.broadcast %91 : vector<16x1xf32> to vector<16x230xf32>
    %93 = arith.addf %90, %92 : vector<16x230xf32>
    %cst_40 = arith.constant 0.000000e+00 : f32
    %94 = vector.broadcast %cst_40 : f32 to vector<16x230xf32>
    %95 = arith.cmpf ogt, %93, %94 : vector<16x230xf32>
    %cst_41 = arith.constant 0.000000e+00 : f32
    %96 = vector.broadcast %cst_41 : f32 to vector<16x230xf32>
    %97 = arith.minimumf %93, %96 : vector<16x230xf32>
    %98 = math.exp %97 : vector<16x230xf32>
    %cst_42 = arith.constant 1.000000e+00 : f32
    %99 = vector.broadcast %cst_42 : f32 to vector<16x230xf32>
    %100 = arith.subf %98, %99 : vector<16x230xf32>
    %101 = arith.select %95, %93, %100 : vector<16x230xi1>, vector<16x230xf32>
    %102 = vector.extract_strided_slice %101 {offsets = [0, 0], sizes = [16, 219], strides = [1, 1]} : vector<16x230xf32> to vector<16x219xf32>
    %103 = vector.extract_strided_slice %101 {offsets = [0, 11], sizes = [16, 219], strides = [1, 1]} : vector<16x230xf32> to vector<16x219xf32>
    %104 = arith.addf %102, %103 : vector<16x219xf32>
    %105 = vector.extract_strided_slice %104 {offsets = [0, 0], sizes = [16, 218], strides = [1, 1]} : vector<16x219xf32> to vector<16x218xf32>
    %106 = vector.extract_strided_slice %104 {offsets = [0, 1], sizes = [16, 218], strides = [1, 1]} : vector<16x219xf32> to vector<16x218xf32>
    %107 = arith.addf %105, %106 : vector<16x218xf32>
    %108 = vector.extract_strided_slice %107 {offsets = [0, 0], sizes = [16, 97], strides = [1, 1]} : vector<16x218xf32> to vector<16x97xf32>
    %109 = vector.extract_strided_slice %107 {offsets = [0, 121], sizes = [16, 97], strides = [1, 1]} : vector<16x218xf32> to vector<16x97xf32>
    %110 = tpu.concatenate %108, %109 in 0 : vector<16x97xf32>, vector<16x97xf32> -> vector<32x97xf32>
    %cst_43 = arith.constant dense<0.000000e+00> : vector<32x25xf32>
    %111 = tpu.matmul %110, %5, %cst_43 {dimension_numbers = #tpu.dot_dimension_numbers<[1], [0], [0], [1], [0, 0, 1, 1], [], []>} : vector<32x97xf32>, vector<97x25xf32>, vector<32x25xf32> -> vector<32x25xf32>
    %c0_44 = arith.constant 0 : index
    %c0_45 = arith.constant 0 : index
    %112 = vector.load %arg13[%c0_44, %c0_45] : memref<25x512xf32, #tpu.memory_space<vmem>>, vector<25x512xf32>
    %cst_46 = arith.constant dense<0.000000e+00> : vector<32x512xf32>
    %113 = tpu.matmul %111, %112, %cst_46 {dimension_numbers = #tpu.dot_dimension_numbers<[1], [0], [0], [1], [0, 0, 1, 1], [], []>} : vector<32x25xf32>, vector<25x512xf32>, vector<32x512xf32> -> vector<32x512xf32>
    %c0_47 = arith.constant 0 : index
    %c0_48 = arith.constant 0 : index
    %114 = vector.load %arg14[%c0_47, %c0_48] : memref<32x512xf32, #tpu.memory_space<vmem>>, vector<32x512xf32>
    %115 = arith.mulf %113, %114 : vector<32x512xf32>
    %116 = vector.extract_strided_slice %115 {offsets = [0, 0], sizes = [16, 512], strides = [1, 1]} : vector<32x512xf32> to vector<16x512xf32>
    %cst_49 = arith.constant dense<0.000000e+00> : vector<512xf32>
    %117 = vector.multi_reduction <add>, %116, %cst_49 [0] : vector<16x512xf32> to vector<512xf32>
    %118 = vector.shape_cast %117 : vector<512xf32> to vector<1x512xf32>
    %119 = vector.extract_strided_slice %115 {offsets = [16, 0], sizes = [16, 512], strides = [1, 1]} : vector<32x512xf32> to vector<16x512xf32>
    %cst_50 = arith.constant dense<0.000000e+00> : vector<512xf32>
    %120 = vector.multi_reduction <add>, %119, %cst_50 [0] : vector<16x512xf32> to vector<512xf32>
    %121 = vector.shape_cast %120 : vector<512xf32> to vector<1x512xf32>
    %122 = tpu.concatenate %118, %121 in 0 : vector<1x512xf32>, vector<1x512xf32> -> vector<2x512xf32>
    %c0_51 = arith.constant 0 : index
    %c0_52 = arith.constant 0 : index
    %123 = vector.load %arg15[%c0_51, %c0_52] : memref<512x32xf32, #tpu.memory_space<vmem>>, vector<512x32xf32>
    %cst_53 = arith.constant dense<0.000000e+00> : vector<2x32xf32>
    %124 = tpu.matmul %122, %123, %cst_53 {dimension_numbers = #tpu.dot_dimension_numbers<[1], [0], [0], [1], [0, 0, 1, 1], [], []>} : vector<2x512xf32>, vector<512x32xf32>, vector<2x32xf32> -> vector<2x32xf32>
    %c0_54 = arith.constant 0 : index
    %c0_55 = arith.constant 0 : index
    %125 = vector.load %arg16[%c0_54, %c0_55] : memref<1x32xf32, #tpu.memory_space<vmem>>, vector<1x32xf32>
    %126 = vector.broadcast %125 : vector<1x32xf32> to vector<2x32xf32>
    %127 = arith.addf %124, %126 : vector<2x32xf32>
    %cst_56 = arith.constant 0.000000e+00 : f32
    %128 = vector.broadcast %cst_56 : f32 to vector<2x32xf32>
    %129 = arith.maximumf %127, %128 : vector<2x32xf32>
    %c0_57 = arith.constant 0 : index
    %c0_58 = arith.constant 0 : index
    %130 = vector.load %arg17[%c0_57, %c0_58] : memref<32x32xf32, #tpu.memory_space<vmem>>, vector<32x32xf32>
    %cst_59 = arith.constant dense<0.000000e+00> : vector<2x32xf32>
    %131 = tpu.matmul %129, %130, %cst_59 {dimension_numbers = #tpu.dot_dimension_numbers<[1], [0], [0], [1], [0, 0, 1, 1], [], []>} : vector<2x32xf32>, vector<32x32xf32>, vector<2x32xf32> -> vector<2x32xf32>
    %c0_60 = arith.constant 0 : index
    %c0_61 = arith.constant 0 : index
    %132 = vector.load %arg18[%c0_60, %c0_61] : memref<1x32xf32, #tpu.memory_space<vmem>>, vector<1x32xf32>
    %133 = vector.broadcast %132 : vector<1x32xf32> to vector<2x32xf32>
    %134 = arith.addf %131, %133 : vector<2x32xf32>
    %cst_62 = arith.constant 0.000000e+00 : f32
    %135 = vector.broadcast %cst_62 : f32 to vector<2x32xf32>
    %136 = arith.maximumf %134, %135 : vector<2x32xf32>
    %c0_63 = arith.constant 0 : index
    %c0_64 = arith.constant 0 : index
    %137 = vector.load %arg19[%c0_63, %c0_64] : memref<32x8xf32, #tpu.memory_space<vmem>>, vector<32x8xf32>
    %cst_65 = arith.constant dense<0.000000e+00> : vector<2x8xf32>
    %138 = tpu.matmul %136, %137, %cst_65 {dimension_numbers = #tpu.dot_dimension_numbers<[1], [0], [0], [1], [0, 0, 1, 1], [], []>} : vector<2x32xf32>, vector<32x8xf32>, vector<2x8xf32> -> vector<2x8xf32>
    %c0_66 = arith.constant 0 : index
    %c0_67 = arith.constant 0 : index
    %139 = vector.load %arg20[%c0_66, %c0_67] : memref<1x8xf32, #tpu.memory_space<vmem>>, vector<1x8xf32>
    %140 = vector.broadcast %139 : vector<1x8xf32> to vector<2x8xf32>
    %141 = arith.addf %138, %140 : vector<2x8xf32>
    %cst_68 = arith.constant dense<0xFF800000> : vector<2xf32>
    %142 = vector.multi_reduction <maximumf>, %141, %cst_68 [1] : vector<2x8xf32> to vector<2xf32>
    %143 = vector.shape_cast %142 : vector<2xf32> to vector<2x1xf32>
    %144 = vector.broadcast %143 : vector<2x1xf32> to vector<2x8xf32>
    %145 = arith.subf %141, %144 : vector<2x8xf32>
    %146 = math.exp %145 : vector<2x8xf32>
    %cst_69 = arith.constant dense<0.000000e+00> : vector<2xf32>
    %147 = vector.multi_reduction <add>, %146, %cst_69 [1] : vector<2x8xf32> to vector<2xf32>
    %148 = vector.shape_cast %147 : vector<2xf32> to vector<2x1xf32>
    %149 = vector.broadcast %148 : vector<2x1xf32> to vector<2x8xf32>
    %150 = arith.divf %146, %149 : vector<2x8xf32>
    %c0_70 = arith.constant 0 : index
    %c0_71 = arith.constant 0 : index
    %151 = vector.load %arg21[%c0_70, %c0_71] : memref<2x8xf32, #tpu.memory_space<vmem>>, vector<2x8xf32>
    tpu.vector_store %arg21[%c0_70, %c0_71], %150 {strides = array<i32>} : memref<2x8xf32, #tpu.memory_space<vmem>>, vector<2x8xf32>,
    return
  }
}

</mosaic_0001>

<llo_original>
// kernel: charmanet_forward.1
$region0: #{charmanet_forward.1}
  #allocation0 [shape = 'u32[]', space=smem, size = 0x4, offset = 0x4, fixed_abs, tag = 'smem constant byte address 0x4 - core index']
  #allocation1 [shape = 'u32[144,128]{1,0:T(1,128)}', space=vmem, size = 0x12000, scoped, tag = 'internal scratch']
  %s0 = inlined_call_operand.vmem [shape: f32[16,629], index: 0, kind: input, shape index: {}]
  %s1 = inlined_call_operand.vmem [shape: f32[1,629], index: 1, kind: input, shape index: {}]
  %s2 = inlined_call_operand.vmem [shape: bf16[305,361], index: 2, kind: input, shape index: {}]
  %s3 = inlined_call_operand.vmem [shape: bf16[321,121], index: 3, kind: input, shape index: {}]
  %s4 = inlined_call_operand.vmem [shape: bf16[97,25], index: 4, kind: input, shape index: {}]
  %s5 = inlined_call_operand.vmem [shape: f32[4,16], index: 5, kind: input, shape index: {}]
  %s6 = inlined_call_operand.vmem [shape: f32[4,1], index: 6, kind: input, shape index: {}]
  %s7 = inlined_call_operand.vmem [shape: f32[4,1], index: 7, kind: input, shape index: {}]
  %s8 = inlined_call_operand.vmem [shape: f32[4,1], index: 8, kind: input, shape index: {}]
  %s9 = inlined_call_operand.vmem [shape: f32[8,16], index: 9, kind: input, shape index: {}]
  %s10 = inlined_call_operand.vmem [shape: f32[8,1], index: 10, kind: input, shape index: {}]
  %s11 = inlined_call_operand.vmem [shape: f32[16,32], index: 11, kind: input, shape index: {}]
  %s12 = inlined_call_operand.vmem [shape: f32[16,1], index: 12, kind: input, shape index: {}]
  %s13 = inlined_call_operand.vmem [shape: f32[25,512], index: 13, kind: input, shape index: {}]
  %s14 = inlined_call_operand.vmem [shape: f32[32,512], index: 14, kind: input, shape index: {}]
  %s15 = inlined_call_operand.vmem [shape: f32[512,32], index: 15, kind: input, shape index: {}]
  %s16 = inlined_call_operand.vmem [shape: f32[1,32], index: 16, kind: input, shape index: {}]
  %s17 = inlined_call_operand.vmem [shape: f32[32,32], index: 17, kind: input, shape index: {}]
  %s18 = inlined_call_operand.vmem [shape: f32[1,32], index: 18, kind: input, shape index: {}]
  %s19 = inlined_call_operand.vmem [shape: f32[32,8], index: 19, kind: input, shape index: {}]
  %s20 = inlined_call_operand.vmem [shape: f32[1,8], index: 20, kind: input, shape index: {}]
  %s21 = inlined_call_operand.hbm [shape: f32[2,8], index: 21, kind: output, shape index: {}]
  %s22 = sld [smem:[#allocation0]]
  $region94: #{charmanet_forward.1} parent=0
    _
  %s24 = ssub.s32 1, %s22
  %s25 = scalar_select 0, %s24, %s22
  $region1: #{charmanet_forward.1} parent=0
    #allocation2 [shape = 'u8[1024]{0}', space=vmem, size = 0x400, scoped, tag = 'output window, operand 0, single buffered']
    #allocation3 [shape = 's32[1]{0}', space=sflag, size = 0x4, scoped, tag = 'scoped memory for charmanet_forward.1']
    %26 = vsyncpa [#allocation3], 0
    // Predicated region
    $region2: #{charmanet_forward.1} parent=1 // pred_check
      _
    $region3: #{charmanet_forward.1} parent=1 // pred_check_branch
      %28 = sbr.rel (0) target = $region5
    $region4: #{charmanet_forward.1} parent=1 // pred_region
      _
    $region5: #{charmanet_forward.1} parent=1 // pred_fallthru
      _
    // Predicated region
    $region6: #{charmanet_forward.1} parent=1 // pred_check
      _
    $region7: #{charmanet_forward.1} parent=1 // pred_check_branch
      %30 = sbr.rel (0) target = $region9
    $region8: #{charmanet_forward.1} parent=1 // pred_region
      _
    $region9: #{charmanet_forward.1} parent=1 // pred_fallthru
      _
    // Predicated region
    $region10: #{charmanet_forward.1} parent=1 // pred_check
      _
    $region11: #{charmanet_forward.1} parent=1 // pred_check_branch
      %32 = sbr.rel (0) target = $region13
    $region12: #{charmanet_forward.1} parent=1 // pred_region
      _
    $region13: #{charmanet_forward.1} parent=1 // pred_fallthru
      _
    // Predicated region
    $region14: #{charmanet_forward.1} parent=1 // pred_check
      _
    $region15: #{charmanet_forward.1} parent=1 // pred_check_branch
      %34 = sbr.rel (0) target = $region17
    $region16: #{charmanet_forward.1} parent=1 // pred_region
      _
    $region17: #{charmanet_forward.1} parent=1 // pred_fallthru
      _
    // Predicated region
    $region18: #{charmanet_forward.1} parent=1 // pred_check
      _
    $region19: #{charmanet_forward.1} parent=1 // pred_check_branch
      %36 = sbr.rel (0) target = $region21
    $region20: #{charmanet_forward.1} parent=1 // pred_region
      _
    $region21: #{charmanet_forward.1} parent=1 // pred_fallthru
      _
    // Predicated region
    $region22: #{charmanet_forward.1} parent=1 // pred_check
      _
    $region23: #{charmanet_forward.1} parent=1 // pred_check_branch
      %38 = sbr.rel (0) target = $region25
    $region24: #{charmanet_forward.1} parent=1 // pred_region
      _
    $region25: #{charmanet_forward.1} parent=1 // pred_fallthru
      _
    // Predicated region
    $region26: #{charmanet_forward.1} parent=1 // pred_check
      _
    $region27: #{charmanet_forward.1} parent=1 // pred_check_branch
      %40 = sbr.rel (0) target = $region29
    $region28: #{charmanet_forward.1} parent=1 // pred_region
      _
    $region29: #{charmanet_forward.1} parent=1 // pred_fallthru
      _
    // Predicated region
    $region30: #{charmanet_forward.1} parent=1 // pred_check
      _
    $region31: #{charmanet_forward.1} parent=1 // pred_check_branch
      %42 = sbr.rel (0) target = $region33
    $region32: #{charmanet_forward.1} parent=1 // pred_region
      _
    $region33: #{charmanet_forward.1} parent=1 // pred_fallthru
      _
    // Predicated region
    $region34: #{charmanet_forward.1} parent=1 // pred_check
      _
    $region35: #{charmanet_forward.1} parent=1 // pred_check_branch
      %44 = sbr.rel (0) target = $region37
    $region36: #{charmanet_forward.1} parent=1 // pred_region
      _
    $region37: #{charmanet_forward.1} parent=1 // pred_fallthru
      _
    // Predicated region
    $region38: #{charmanet_forward.1} parent=1 // pred_check
      _
    $region39: #{charmanet_forward.1} parent=1 // pred_check_branch
      %46 = sbr.rel (0) target = $region41
    $region40: #{charmanet_forward.1} parent=1 // pred_region
      _
    $region41: #{charmanet_forward.1} parent=1 // pred_fallthru
      _
    // Predicated region
    $region42: #{charmanet_forward.1} parent=1 // pred_check
      _
    $region43: #{charmanet_forward.1} parent=1 // pred_check_branch
      %48 = sbr.rel (0) target = $region45
    $region44: #{charmanet_forward.1} parent=1 // pred_region
      _
    $region45: #{charmanet_forward.1} parent=1 // pred_fallthru
      _
    // Predicated region
    $region46: #{charmanet_forward.1} parent=1 // pred_check
      _
    $region47: #{charmanet_forward.1} parent=1 // pred_check_branch
      %50 = sbr.rel (0) target = $region49
    $region48: #{charmanet_forward.1} parent=1 // pred_region
      _
    $region49: #{charmanet_forward.1} parent=1 // pred_fallthru
      _
    // Predicated region
    $region50: #{charmanet_forward.1} parent=1 // pred_check
      _
    $region51: #{charmanet_forward.1} parent=1 // pred_check_branch
      %52 = sbr.rel (0) target = $region53
    $region52: #{charmanet_forward.1} parent=1 // pred_region
      _
    $region53: #{charmanet_forward.1} parent=1 // pred_fallthru
      _
    // Predicated region
    $region54: #{charmanet_forward.1} parent=1 // pred_check
      _
    $region55: #{charmanet_forward.1} parent=1 // pred_check_branch
      %54 = sbr.rel (0) target = $region57
    $region56: #{charmanet_forward.1} parent=1 // pred_region
      _
    $region57: #{charmanet_forward.1} parent=1 // pred_fallthru
      _
    // Predicated region
    $region58: #{charmanet_forward.1} parent=1 // pred_check
      _
    $region59: #{charmanet_forward.1} parent=1 // pred_check_branch
      %56 = sbr.rel (0) target = $region61
    $region60: #{charmanet_forward.1} parent=1 // pred_region
      _
    $region61: #{charmanet_forward.1} parent=1 // pred_fallthru
      _
    // Predicated region
    $region62: #{charmanet_forward.1} parent=1 // pred_check
      _
    $region63: #{charmanet_forward.1} parent=1 // pred_check_branch
      %58 = sbr.rel (0) target = $region65
    $region64: #{charmanet_forward.1} parent=1 // pred_region
      _
    $region65: #{charmanet_forward.1} parent=1 // pred_fallthru
      _
    // Predicated region
    $region66: #{charmanet_forward.1} parent=1 // pred_check
      _
    $region67: #{charmanet_forward.1} parent=1 // pred_check_branch
      %60 = sbr.rel (0) target = $region69
    $region68: #{charmanet_forward.1} parent=1 // pred_region
      _
    $region69: #{charmanet_forward.1} parent=1 // pred_fallthru
      _
    // Predicated region
    $region70: #{charmanet_forward.1} parent=1 // pred_check
      _
    $region71: #{charmanet_forward.1} parent=1 // pred_check_branch
      %62 = sbr.rel (0) target = $region73
    $region72: #{charmanet_forward.1} parent=1 // pred_region
      _
    $region73: #{charmanet_forward.1} parent=1 // pred_fallthru
      _
    // Predicated region
    $region74: #{charmanet_forward.1} parent=1 // pred_check
      _
    $region75: #{charmanet_forward.1} parent=1 // pred_check_branch
      %64 = sbr.rel (0) target = $region77
    $region76: #{charmanet_forward.1} parent=1 // pred_region
      _
    $region77: #{charmanet_forward.1} parent=1 // pred_fallthru
      _
    // Predicated region
    $region78: #{charmanet_forward.1} parent=1 // pred_check
      _
    $region79: #{charmanet_forward.1} parent=1 // pred_check_branch
      %66 = sbr.rel (0) target = $region81
    $region80: #{charmanet_forward.1} parent=1 // pred_region
      _
    $region81: #{charmanet_forward.1} parent=1 // pred_fallthru
      _
    // Predicated region
    $region82: #{charmanet_forward.1} parent=1 // pred_check
      _
    $region83: #{charmanet_forward.1} parent=1 // pred_check_branch
      %68 = sbr.rel (0) target = $region85
    $region84: #{charmanet_forward.1} parent=1 // pred_region
      _
    $region85: #{charmanet_forward.1} parent=1 // pred_fallthru
      _
    %v69 = vld [vmem:[%s2] sm:$0xff]
    %v70 = vld [vmem:[%s2 + $0x8] sm:$0xf]
    %v71 = vld [vmem:[%s2 + $0xc] sm:$0xff]
    %v72 = vld [vmem:[%s2 + $0x14] sm:$0xf]
    %v73 = vld [vmem:[%s2 + $0x18] sm:$0xff]
    %v74 = vld [vmem:[%s2 + $0x20] sm:$0xf]
    %v75 = vld [vmem:[%s2 + $0x24] sm:$0xff]
    %v76 = vld [vmem:[%s2 + $0x2c] sm:$0xf]
    %v77 = vld [vmem:[%s2 + $0x30] sm:$0xff]
    %v78 = vld [vmem:[%s2 + $0x38] sm:$0xf]
    %v79 = vld [vmem:[%s2 + $0x3c] sm:$0xff]
    %v80 = vld [vmem:[%s2 + $0x44] sm:$0xf]
    %v81 = vld [vmem:[%s2 + $0x48] sm:$0xff]
    %v82 = vld [vmem:[%s2 + $0x50] sm:$0xf]
    %v83 = vld [vmem:[%s2 + $0x54] sm:$0xff]
    %v84 = vld [vmem:[%s2 + $0x5c] sm:$0xf]
    %v85 = vld [vmem:[%s2 + $0x60] sm:$0xff]
    %v86 = vld [vmem:[%s2 + $0x68] sm:$0xf]
    %v87 = vld [vmem:[%s2 + $0x6c] sm:$0xff]
    %v88 = vld [vmem:[%s2 + $0x74] sm:$0xf]
    %v89 = vld [vmem:[%s2 + $0x78] sm:$0xff]
    %v90 = vld [vmem:[%s2 + $0x80] sm:$0xf]
    %v91 = vld [vmem:[%s2 + $0x84] sm:$0xff]
    %v92 = vld [vmem:[%s2 + $0x8c] sm:$0xf]
    %v93 = vld [vmem:[%s2 + $0x90] sm:$0xff]
    %v94 = vld [vmem:[%s2 + $0x98] sm:$0xf]
    %v95 = vld [vmem:[%s2 + $0x9c] sm:$0xff]
    %v96 = vld [vmem:[%s2 + $0xa4] sm:$0xf]
    %v97 = vld [vmem:[%s2 + $0xa8] sm:$0xff]
    %v98 = vld [vmem:[%s2 + $0xb0] sm:$0xf]
    %v99 = vld [vmem:[%s2 + $0xb4] sm:$0xff]
    %v100 = vld [vmem:[%s2 + $0xbc] sm:$0xf]
    %v101 = vld [vmem:[%s2 + $0xc0] sm:$0xff]
    %v102 = vld [vmem:[%s2 + $0xc8] sm:$0xf]
    %v103 = vld [vmem:[%s2 + $0xcc] sm:$0xff]
    %v104 = vld [vmem:[%s2 + $0xd4] sm:$0xf]
    %v105 = vld [vmem:[%s2 + $0xd8] sm:$0xff]
    %v106 = vld [vmem:[%s2 + $0xe0] sm:$0xf]
    %v107 = vld [vmem:[%s2 + $0xe4] sm:$0xff]
    %v108 = vld [vmem:[%s2 + $0xec] sm:$0xf]
    %v109 = vld [vmem:[%s2 + $0xf0] sm:$0xff]
    %v110 = vld [vmem:[%s2 + $0xf8] sm:$0xf]
    %v111 = vld [vmem:[%s2 + $0xfc] sm:$0xff]
    %v112 = vld [vmem:[%s2 + $0x104] sm:$0xf]
    %v113 = vld [vmem:[%s2 + $0x108] sm:$0xff]
    %v114 = vld [vmem:[%s2 + $0x110] sm:$0xf]
    %v115 = vld [vmem:[%s2 + $0x114] sm:$0xff]
    %v116 = vld [vmem:[%s2 + $0x11c] sm:$0xf]
    %v117 = vld [vmem:[%s2 + $0x120] sm:$0xff]
    %v118 = vld [vmem:[%s2 + $0x128] sm:$0xf]
    %v119 = vld [vmem:[%s2 + $0x12c] sm:$0xff]
    %v120 = vld [vmem:[%s2 + $0x134] sm:$0xf]
    %v121 = vld [vmem:[%s2 + $0x138] sm:$0xff]
    %v122 = vld [vmem:[%s2 + $0x140] sm:$0xf]
    %v123 = vld [vmem:[%s2 + $0x144] sm:$0xff]
    %v124 = vld [vmem:[%s2 + $0x14c] sm:$0xf]
    %v125 = vld [vmem:[%s2 + $0x150] sm:$0xff]
    %v126 = vld [vmem:[%s2 + $0x158] sm:$0xf]
    %v127 = vld [vmem:[%s2 + $0x15c] sm:$0xff]
    %v128 = vld [vmem:[%s2 + $0x164] sm:$0xf]
    %v129 = vld [vmem:[%s2 + $0x168] sm:$0xff]
    %v130 = vld [vmem:[%s2 + $0x170] sm:$0xf]
    %v131 = vld [vmem:[%s2 + $0x174] sm:$0xff]
    %v132 = vld [vmem:[%s2 + $0x17c] sm:$0xf]
    %v133 = vld [vmem:[%s2 + $0x180] sm:$0xff]
    %v134 = vld [vmem:[%s2 + $0x188] sm:$0xf]
    %v135 = vld [vmem:[%s2 + $0x18c] sm:$0xff]
    %v136 = vld [vmem:[%s2 + $0x194] sm:$0xf]
    %v137 = vld [vmem:[%s2 + $0x198] sm:$0xff]
    %v138 = vld [vmem:[%s2 + $0x1a0] sm:$0xf]
    %v139 = vld [vmem:[%s2 + $0x1a4] sm:$0xff]
    %v140 = vld [vmem:[%s2 + $0x1ac] sm:$0xf]
    %v141 = vld [vmem:[%s2 + $0x1b0] sm:$0xff]
    %v142 = vld [vmem:[%s2 + $0x1b8] sm:$0xf]
    %v143 = vld [vmem:[%s2 + $0x1bc] sm:$0xff]
    %v144 = vld [vmem:[%s2 + $0x1c4] sm:$0xf]
    %v145 = vld [vmem:[%s2 + $0x1c8] sm:$0x11]
    %v146 = vld [vmem:[%s2 + $0x1d0] sm:$0x1]
    %v147 = vunpack.c.l.bf16 %v69
    %v148 = vunpack.c.h.bf16 %v69
    %v149 = vunpack.c.l.bf16 %v70
    %v150 = vunpack.c.l.bf16 %v71
    %v151 = vunpack.c.h.bf16 %v71
    %v152 = vunpack.c.l.bf16 %v72
    %v153 = vunpack.c.l.bf16 %v73
    %v154 = vunpack.c.h.bf16 %v73
    %v155 = vunpack.c.l.bf16 %v74
    %v156 = vunpack.c.l.bf16 %v75
    %v157 = vunpack.c.h.bf16 %v75
    %v158 = vunpack.c.l.bf16 %v76
    %v159 = vunpack.c.l.bf16 %v77
    %v160 = vunpack.c.h.bf16 %v77
    %v161 = vunpack.c.l.bf16 %v78
    %v162 = vunpack.c.l.bf16 %v79
    %v163 = vunpack.c.h.bf16 %v79
    %v164 = vunpack.c.l.bf16 %v80
    %v165 = vunpack.c.l.bf16 %v81
    %v166 = vunpack.c.h.bf16 %v81
    %v167 = vunpack.c.l.bf16 %v82
    %v168 = vunpack.c.l.bf16 %v83
    %v169 = vunpack.c.h.bf16 %v83
    %v170 = vunpack.c.l.bf16 %v84
    %v171 = vunpack.c.l.bf16 %v85
    %v172 = vunpack.c.h.bf16 %v85
    %v173 = vunpack.c.l.bf16 %v86
    %v174 = vunpack.c.l.bf16 %v87
    %v175 = vunpack.c.h.bf16 %v87
    %v176 = vunpack.c.l.bf16 %v88
    %v177 = vunpack.c.l.bf16 %v89
    %v178 = vunpack.c.h.bf16 %v89
    %v179 = vunpack.c.l.bf16 %v90
    %v180 = vunpack.c.l.bf16 %v91
    %v181 = vunpack.c.h.bf16 %v91
    %v182 = vunpack.c.l.bf16 %v92
    %v183 = vunpack.c.l.bf16 %v93
    %v184 = vunpack.c.h.bf16 %v93
    %v185 = vunpack.c.l.bf16 %v94
    %v186 = vunpack.c.l.bf16 %v95
    %v187 = vunpack.c.h.bf16 %v95
    %v188 = vunpack.c.l.bf16 %v96
    %v189 = vunpack.c.l.bf16 %v97
    %v190 = vunpack.c.h.bf16 %v97
    %v191 = vunpack.c.l.bf16 %v98
    %v192 = vunpack.c.l.bf16 %v99
    %v193 = vunpack.c.h.bf16 %v99
    %v194 = vunpack.c.l.bf16 %v100
    %v195 = vunpack.c.l.bf16 %v101
    %v196 = vunpack.c.h.bf16 %v101
    %v197 = vunpack.c.l.bf16 %v102
    %v198 = vunpack.c.l.bf16 %v103
    %v199 = vunpack.c.h.bf16 %v103
    %v200 = vunpack.c.l.bf16 %v104
    %v201 = vunpack.c.l.bf16 %v105
    %v202 = vunpack.c.h.bf16 %v105
    %v203 = vunpack.c.l.bf16 %v106
    %v204 = vunpack.c.l.bf16 %v107
    %v205 = vunpack.c.h.bf16 %v107
    %v206 = vunpack.c.l.bf16 %v108
    %v207 = vunpack.c.l.bf16 %v109
    %v208 = vunpack.c.h.bf16 %v109
    %v209 = vunpack.c.l.bf16 %v110
    %v210 = vunpack.c.l.bf16 %v111
    %v211 = vunpack.c.h.bf16 %v111
    %v212 = vunpack.c.l.bf16 %v112
    %v213 = vunpack.c.l.bf16 %v113
    %v214 = vunpack.c.h.bf16 %v113
    %v215 = vunpack.c.l.bf16 %v114
    %v216 = vunpack.c.l.bf16 %v115
    %v217 = vunpack.c.h.bf16 %v115
    %v218 = vunpack.c.l.bf16 %v116
    %v219 = vunpack.c.l.bf16 %v117
    %v220 = vunpack.c.h.bf16 %v117
    %v221 = vunpack.c.l.bf16 %v118
    %v222 = vunpack.c.l.bf16 %v119
    %v223 = vunpack.c.h.bf16 %v119
    %v224 = vunpack.c.l.bf16 %v120
    %v225 = vunpack.c.l.bf16 %v121
    %v226 = vunpack.c.h.bf16 %v121
    %v227 = vunpack.c.l.bf16 %v122
    %v228 = vunpack.c.l.bf16 %v123
    %v229 = vunpack.c.h.bf16 %v123
    %v230 = vunpack.c.l.bf16 %v124
    %v231 = vunpack.c.l.bf16 %v125
    %v232 = vunpack.c.h.bf16 %v125
    %v233 = vunpack.c.l.bf16 %v126
    %v234 = vunpack.c.l.bf16 %v127
    %v235 = vunpack.c.h.bf16 %v127
    %v236 = vunpack.c.l.bf16 %v128
    %v237 = vunpack.c.l.bf16 %v129
    %v238 = vunpack.c.h.bf16 %v129
    %v239 = vunpack.c.l.bf16 %v130
    %v240 = vunpack.c.l.bf16 %v131
    %v241 = vunpack.c.h.bf16 %v131
    %v242 = vunpack.c.l.bf16 %v132
    %v243 = vunpack.c.l.bf16 %v133
    %v244 = vunpack.c.h.bf16 %v133
    %v245 = vunpack.c.l.bf16 %v134
    %v246 = vunpack.c.l.bf16 %v135
    %v247 = vunpack.c.h.bf16 %v135
    %v248 = vunpack.c.l.bf16 %v136
    %v249 = vunpack.c.l.bf16 %v137
    %v250 = vunpack.c.h.bf16 %v137
    %v251 = vunpack.c.l.bf16 %v138
    %v252 = vunpack.c.l.bf16 %v139
    %v253 = vunpack.c.h.bf16 %v139
    %v254 = vunpack.c.l.bf16 %v140
    %v255 = vunpack.c.l.bf16 %v141
    %v256 = vunpack.c.h.bf16 %v141
    %v257 = vunpack.c.l.bf16 %v142
    %v258 = vunpack.c.l.bf16 %v143
    %v259 = vunpack.c.h.bf16 %v143
    %v260 = vunpack.c.l.bf16 %v144
    %v261 = vunpack.c.l.bf16 %v145
    %v262 = vunpack.c.h.bf16 %v145
    %v263 = vunpack.c.l.bf16 %v146
    %v264 = vld [vmem:[%s3] sm:$0xf]
    %v265 = vld [vmem:[%s3 + $0x4] sm:$0xf]
    %v266 = vld [vmem:[%s3 + $0x8] sm:$0xf]
    %v267 = vld [vmem:[%s3 + $0xc] sm:$0xf]
    %v268 = vld [vmem:[%s3 + $0x10] sm:$0xf]
    %v269 = vld [vmem:[%s3 + $0x14] sm:$0xf]
    %v270 = vld [vmem:[%s3 + $0x18] sm:$0xf]
    %v271 = vld [vmem:[%s3 + $0x1c] sm:$0xf]
    %v272 = vld [vmem:[%s3 + $0x20] sm:$0xf]
    %v273 = vld [vmem:[%s3 + $0x24] sm:$0xf]
    %v274 = vld [vmem:[%s3 + $0x28] sm:$0xf]
    %v275 = vld [vmem:[%s3 + $0x2c] sm:$0xf]
    %v276 = vld [vmem:[%s3 + $0x30] sm:$0xf]
    %v277 = vld [vmem:[%s3 + $0x34] sm:$0xf]
    %v278 = vld [vmem:[%s3 + $0x38] sm:$0xf]
    %v279 = vld [vmem:[%s3 + $0x3c] sm:$0xf]
    %v280 = vld [vmem:[%s3 + $0x40] sm:$0xf]
    %v281 = vld [vmem:[%s3 + $0x44] sm:$0xf]
    %v282 = vld [vmem:[%s3 + $0x48] sm:$0xf]
    %v283 = vld [vmem:[%s3 + $0x4c] sm:$0xf]
    %v284 = vld [vmem:[%s3 + $0x50] sm:$0xf]
    %v285 = vld [vmem:[%s3 + $0x54] sm:$0xf]
    %v286 = vld [vmem:[%s3 + $0x58] sm:$0xf]
    %v287 = vld [vmem:[%s3 + $0x5c] sm:$0xf]
    %v288 = vld [vmem:[%s3 + $0x60] sm:$0xf]
    %v289 = vld [vmem:[%s3 + $0x64] sm:$0xf]
    %v290 = vld [vmem:[%s3 + $0x68] sm:$0xf]
    %v291 = vld [vmem:[%s3 + $0x6c] sm:$0xf]
    %v292 = vld [vmem:[%s3 + $0x70] sm:$0xf]
    %v293 = vld [vmem:[%s3 + $0x74] sm:$0xf]
    %v294 = vld [vmem:[%s3 + $0x78] sm:$0xf]
    %v295 = vld [vmem:[%s3 + $0x7c] sm:$0xf]
    %v296 = vld [vmem:[%s3 + $0x80] sm:$0xf]
    %v297 = vld [vmem:[%s3 + $0x84] sm:$0xf]
    %v298 = vld [vmem:[%s3 + $0x88] sm:$0xf]
    %v299 = vld [vmem:[%s3 + $0x8c] sm:$0xf]
    %v300 = vld [vmem:[%s3 + $0x90] sm:$0xf]
    %v301 = vld [vmem:[%s3 + $0x94] sm:$0xf]
    %v302 = vld [vmem:[%s3 + $0x98] sm:$0xf]
    %v303 = vld [vmem:[%s3 + $0x9c] sm:$0xf]
    %v304 = vld [vmem:[%s3 + $0xa0] sm:$0x1]
    %v305 = vunpack.c.l.bf16 %v264
    %v306 = vunpack.c.l.bf16 %v265
    %v307 = vunpack.c.l.bf16 %v266
    %v308 = vunpack.c.l.bf16 %v267
    %v309 = vunpack.c.l.bf16 %v268
    %v310 = vunpack.c.l.bf16 %v269
    %v311 = vunpack.c.l.bf16 %v270
    %v312 = vunpack.c.l.bf16 %v271
    %v313 = vunpack.c.l.bf16 %v272
    %v314 = vunpack.c.l.bf16 %v273
    %v315 = vunpack.c.l.bf16 %v274
    %v316 = vunpack.c.l.bf16 %v275
    %v317 = vunpack.c.l.bf16 %v276
    %v318 = vunpack.c.l.bf16 %v277
    %v319 = vunpack.c.l.bf16 %v278
    %v320 = vunpack.c.l.bf16 %v279
    %v321 = vunpack.c.l.bf16 %v280
    %v322 = vunpack.c.l.bf16 %v281
    %v323 = vunpack.c.l.bf16 %v282
    %v324 = vunpack.c.l.bf16 %v283
    %v325 = vunpack.c.l.bf16 %v284
    %v326 = vunpack.c.l.bf16 %v285
    %v327 = vunpack.c.l.bf16 %v286
    %v328 = vunpack.c.l.bf16 %v287
    %v329 = vunpack.c.l.bf16 %v288
    %v330 = vunpack.c.l.bf16 %v289
    %v331 = vunpack.c.l.bf16 %v290
    %v332 = vunpack.c.l.bf16 %v291
    %v333 = vunpack.c.l.bf16 %v292
    %v334 = vunpack.c.l.bf16 %v293
    %v335 = vunpack.c.l.bf16 %v294
    %v336 = vunpack.c.l.bf16 %v295
    %v337 = vunpack.c.l.bf16 %v296
    %v338 = vunpack.c.l.bf16 %v297
    %v339 = vunpack.c.l.bf16 %v298
    %v340 = vunpack.c.l.bf16 %v299
    %v341 = vunpack.c.l.bf16 %v300
    %v342 = vunpack.c.l.bf16 %v301
    %v343 = vunpack.c.l.bf16 %v302
    %v344 = vunpack.c.l.bf16 %v303
    %v345 = vunpack.c.l.bf16 %v304
    %v346 = vld [vmem:[%s4] sm:$0xf]
    %v347 = vld [vmem:[%s4 + $0x4] sm:$0xf]
    %v348 = vld [vmem:[%s4 + $0x8] sm:$0xf]
    %v349 = vld [vmem:[%s4 + $0xc] sm:$0xf]
    %v350 = vld [vmem:[%s4 + $0x10] sm:$0xf]
    %v351 = vld [vmem:[%s4 + $0x14] sm:$0xf]
    %v352 = vld [vmem:[%s4 + $0x18] sm:$0xf]
    %v353 = vld [vmem:[%s4 + $0x1c] sm:$0xf]
    %v354 = vld [vmem:[%s4 + $0x20] sm:$0xf]
    %v355 = vld [vmem:[%s4 + $0x24] sm:$0xf]
    %v356 = vld [vmem:[%s4 + $0x28] sm:$0xf]
    %v357 = vld [vmem:[%s4 + $0x2c] sm:$0xf]
    %v358 = vld [vmem:[%s4 + $0x30] sm:$0x1]
    %v359 = vunpack.c.l.bf16 %v346
    %v360 = vunpack.c.l.bf16 %v347
    %v361 = vunpack.c.l.bf16 %v348
    %v362 = vunpack.c.l.bf16 %v349
    %v363 = vunpack.c.l.bf16 %v350
    %v364 = vunpack.c.l.bf16 %v351
    %v365 = vunpack.c.l.bf16 %v352
    %v366 = vunpack.c.l.bf16 %v353
    %v367 = vunpack.c.l.bf16 %v354
    %v368 = vunpack.c.l.bf16 %v355
    %v369 = vunpack.c.l.bf16 %v356
    %v370 = vunpack.c.l.bf16 %v357
    %v371 = vunpack.c.l.bf16 %v358
    %v372 = vld [vmem:[%s5] sm:$0xf]
    %v373 = vld [vmem:[%s0] sm:$0xff]
    %v374 = vld [vmem:[%s0 + $0x8] sm:$0xff]
    %v375 = vld [vmem:[%s0 + $0x10] sm:$0xff]
    %v376 = vld [vmem:[%s0 + $0x18] sm:$0xff]
    %v377 = vld [vmem:[%s0 + $0x20] sm:$0xff]
    %v378 = vld [vmem:[%s0 + $0x28] sm:$0xff]
    %v379 = vld [vmem:[%s0 + $0x30] sm:$0xff]
    %v380 = vld [vmem:[%s0 + $0x38] sm:$0xff]
    %v381 = vld [vmem:[%s0 + $0x40] sm:$0xff]
    %v382 = vld [vmem:[%s0 + $0x48] sm:$0xff]
    %v383 = vld [vmem:[%s6] sm:$0xf]
    %385 = vset.pattern.permute.xlu0 0
    %386 = vperm.xlu0 %385, %v383
    %v387 = vpop.permute.xlu0 %386
    %vm389 = vcmask 130048
    %v391 = vsel %vm389, %v372, 0
    %393 = vmatprep.subr.mxu0 %v374
    %394 = vmatpush1.msra.mxu0 %v373
    %395 = vmatprep.subr.mxu0 %v379
    %396 = vmatpush1.msra.mxu0 %v378
    %397 = vmatprep.subr.mxu0 0.0
    %398 = vmatpush1.msra.mxu0 0.0
    %399 = vmatprep.subr.mxu0 0.0
    %400 = vmatpush1.msra.mxu0 0.0
    %401 = vmatprep.subr.mxu0 0.0
    %402 = vmatpush1.msra.mxu0 0.0
    %403 = vmatprep.subr.mxu0 0.0
    %404 = vmatpush1.msra.mxu0 0.0
    %405 = vmatprep.subr.mxu0 0.0
    %406 = vmatpush1.msra.mxu0 0.0
    %407 = vmatprep.subr.mxu0 0.0
    %408 = vmatpush1.msra.mxu0 0.0
    %409 = vmatprep.subr.mxu0 0.0
    %410 = vmatpush1.msra.mxu0 0.0
    %411 = vmatprep.subr.mxu0 0.0
    %412 = vmatpush1.msra.mxu0 0.0
    %413 = vmatprep.subr.mxu0 0.0
    %414 = vmatpush1.msra.mxu0 0.0
    %415 = vmatprep.subr.mxu0 0.0
    %416 = vmatpush1.msra.mxu0 0.0
    %417 = vmatprep.subr.mxu0 0.0
    %418 = vmatpush1.msra.mxu0 0.0
    %419 = vmatprep.subr.mxu0 0.0
    %420 = vmatpush1.msra.mxu0 0.0
    %421 = vmatprep.subr.mxu0 0.0
    %422 = vmatpush1.msra.mxu0 0.0
    %423 = vmatprep.subr.mxu0 0.0
    %424 = vmatpush1.msra.mxu0 0.0
    %425 = vmatprep.subr.mxu0 0.0
    %426 = vmatpush1.msra.mxu0 0.0
    %427 = vmatprep.subr.mxu0 0.0
    %428 = vmatpush1.msra.mxu0 0.0
    %429 = vmatprep.subr.mxu0 0.0
    %430 = vmatpush1.msra.mxu0 0.0
    %431 = vmatprep.subr.mxu0 0.0
    %432 = vmatpush1.msra.mxu0 0.0
    %433 = vmatprep.subr.mxu0 0.0
    %434 = vmatpush1.msra.mxu0 0.0
    %435 = vmatprep.subr.mxu0 0.0
    %436 = vmatpush1.msra.mxu0 0.0
    %437 = vmatprep.subr.mxu0 0.0
    %438 = vmatpush1.msra.mxu0 0.0
    %439 = vmatprep.subr.mxu0 0.0
    %440 = vmatpush1.msra.mxu0 0.0
    %441 = vmatprep.subr.mxu0 0.0
    %442 = vmatpush1.msra.mxu0 0.0
    %443 = vmatprep.subr.mxu0 0.0
    %444 = vmatpush1.msra.mxu0 0.0
    %445 = vmatprep.subr.mxu0 0.0
    %446 = vmatpush1.msra.mxu0 0.0
    %447 = vmatprep.subr.mxu0 0.0
    %448 = vmatpush1.msra.mxu0 0.0
    %449 = vmatprep.subr.mxu0 0.0
    %450 = vmatpush1.msra.mxu0 0.0
    %451 = vmatprep.subr.mxu0 0.0
    %452 = vmatpush1.msra.mxu0 0.0
    %453 = vmatprep.subr.mxu0 0.0
    %454 = vmatpush1.msra.mxu0 0.0
    %455 = vmatprep.subr.mxu0 0.0
    %456 = vmatpush1.msra.mxu0 0.0
    %457 = vmatprep.mubr.f32.mxu0 0.0
    %458 = vmatmul.mubr.f32.gmra.mrb[0].mxu0 %v391
    %v459 = vpop.f32.mrb[0].mxu0
    %v460 = vadd.f32 %v387, %v459
    %v461 = vpop.f32.mrb[0].mxu0
    %v462 = vadd.f32 %v387, %v461
    %463 = vdwg.mxu0
    %464 = vmatprep.subr.mxu0 %v376
    %465 = vmatpush1.msra.mxu0 %v375
    %466 = vmatprep.subr.mxu0 %v381
    %467 = vmatpush1.msra.mxu0 %v380
    %468 = vmatprep.subr.mxu0 0.0
    %469 = vmatpush1.msra.mxu0 0.0
    %470 = vmatprep.subr.mxu0 0.0
    %471 = vmatpush1.msra.mxu0 0.0
    %472 = vmatprep.subr.mxu0 0.0
    %473 = vmatpush1.msra.mxu0 0.0
    %474 = vmatprep.subr.mxu0 0.0
    %475 = vmatpush1.msra.mxu0 0.0
    %476 = vmatprep.subr.mxu0 0.0
    %477 = vmatpush1.msra.mxu0 0.0
    %478 = vmatprep.subr.mxu0 0.0
    %479 = vmatpush1.msra.mxu0 0.0
    %480 = vmatprep.subr.mxu0 0.0
    %481 = vmatpush1.msra.mxu0 0.0
    %482 = vmatprep.subr.mxu0 0.0
    %483 = vmatpush1.msra.mxu0 0.0
    %484 = vmatprep.subr.mxu0 0.0
    %485 = vmatpush1.msra.mxu0 0.0
    %486 = vmatprep.subr.mxu0 0.0
    %487 = vmatpush1.msra.mxu0 0.0
    %488 = vmatprep.subr.mxu0 0.0
    %489 = vmatpush1.msra.mxu0 0.0
    %490 = vmatprep.subr.mxu0 0.0
    %491 = vmatpush1.msra.mxu0 0.0
    %492 = vmatprep.subr.mxu0 0.0
    %493 = vmatpush1.msra.mxu0 0.0
    %494 = vmatprep.subr.mxu0 0.0
    %495 = vmatpush1.msra.mxu0 0.0
    %496 = vmatprep.subr.mxu0 0.0
    %497 = vmatpush1.msra.mxu0 0.0
    %498 = vmatprep.subr.mxu0 0.0
    %499 = vmatpush1.msra.mxu0 0.0
    %500 = vmatprep.subr.mxu0 0.0
    %501 = vmatpush1.msra.mxu0 0.0
    %502 = vmatprep.subr.mxu0 0.0
    %503 = vmatpush1.msra.mxu0 0.0
    %504 = vmatprep.subr.mxu0 0.0
    %505 = vmatpush1.msra.mxu0 0.0
    %506 = vmatprep.subr.mxu0 0.0
    %507 = vmatpush1.msra.mxu0 0.0
    %508 = vmatprep.subr.mxu0 0.0
    %509 = vmatpush1.msra.mxu0 0.0
    %510 = vmatprep.subr.mxu0 0.0
    %511 = vmatpush1.msra.mxu0 0.0
    %512 = vmatprep.subr.mxu0 0.0
    %513 = vmatpush1.msra.mxu0 0.0
    %514 = vmatprep.subr.mxu0 0.0
    %515 = vmatpush1.msra.mxu0 0.0
    %516 = vmatprep.subr.mxu0 0.0
    %517 = vmatpush1.msra.mxu0 0.0
    %518 = vmatprep.subr.mxu0 0.0
    %519 = vmatpush1.msra.mxu0 0.0
    %520 = vmatprep.subr.mxu0 0.0
    %521 = vmatpush1.msra.mxu0 0.0
    %522 = vmatprep.subr.mxu0 0.0
    %523 = vmatpush1.msra.mxu0 0.0
    %524 = vmatprep.subr.mxu0 0.0
    %525 = vmatpush1.msra.mxu0 0.0
    %526 = vmatprep.subr.mxu0 0.0
    %527 = vmatpush1.msra.mxu0 0.0
    %528 = vmatprep.mubr.f32.mxu0 0.0
    %529 = vmatmul.mubr.f32.gmra.mrb[0].mxu0 %v391
    %v530 = vpop.f32.mrb[0].mxu0
    %v531 = vadd.f32 %v387, %v530
    %v532 = vpop.f32.mrb[0].mxu0
    %v533 = vadd.f32 %v387, %v532
    %534 = vdwg.mxu0
    %535 = vmatprep.subr.mxu0 0.0
    %536 = vmatpush1.msra.mxu0 %v377
    %537 = vmatprep.subr.mxu0 0.0
    %538 = vmatpush1.msra.mxu0 %v382
    %539 = vmatprep.subr.mxu0 0.0
    %540 = vmatpush1.msra.mxu0 0.0
    %541 = vmatprep.subr.mxu0 0.0
    %542 = vmatpush1.msra.mxu0 0.0
    %543 = vmatprep.subr.mxu0 0.0
    %544 = vmatpush1.msra.mxu0 0.0
    %545 = vmatprep.subr.mxu0 0.0
    %546 = vmatpush1.msra.mxu0 0.0
    %547 = vmatprep.subr.mxu0 0.0
    %548 = vmatpush1.msra.mxu0 0.0
    %549 = vmatprep.subr.mxu0 0.0
    %550 = vmatpush1.msra.mxu0 0.0
    %551 = vmatprep.subr.mxu0 0.0
    %552 = vmatpush1.msra.mxu0 0.0
    %553 = vmatprep.subr.mxu0 0.0
    %554 = vmatpush1.msra.mxu0 0.0
    %555 = vmatprep.subr.mxu0 0.0
    %556 = vmatpush1.msra.mxu0 0.0
    %557 = vmatprep.subr.mxu0 0.0
    %558 = vmatpush1.msra.mxu0 0.0
    %559 = vmatprep.subr.mxu0 0.0
    %560 = vmatpush1.msra.mxu0 0.0
    %561 = vmatprep.subr.mxu0 0.0
    %562 = vmatpush1.msra.mxu0 0.0
    %563 = vmatprep.subr.mxu0 0.0
    %564 = vmatpush1.msra.mxu0 0.0
    %565 = vmatprep.subr.mxu0 0.0
    %566 = vmatpush1.msra.mxu0 0.0
    %567 = vmatprep.subr.mxu0 0.0
    %568 = vmatpush1.msra.mxu0 0.0
    %569 = vmatprep.subr.mxu0 0.0
    %570 = vmatpush1.msra.mxu0 0.0
    %571 = vmatprep.subr.mxu0 0.0
    %572 = vmatpush1.msra.mxu0 0.0
    %573 = vmatprep.subr.mxu0 0.0
    %574 = vmatpush1.msra.mxu0 0.0
    %575 = vmatprep.subr.mxu0 0.0
    %576 = vmatpush1.msra.mxu0 0.0
    %577 = vmatprep.subr.mxu0 0.0
    %578 = vmatpush1.msra.mxu0 0.0
    %579 = vmatprep.subr.mxu0 0.0
    %580 = vmatpush1.msra.mxu0 0.0
    %581 = vmatprep.subr.mxu0 0.0
    %582 = vmatpush1.msra.mxu0 0.0
    %583 = vmatprep.subr.mxu0 0.0
    %584 = vmatpush1.msra.mxu0 0.0
    %585 = vmatprep.subr.mxu0 0.0
    %586 = vmatpush1.msra.mxu0 0.0
    %587 = vmatprep.subr.mxu0 0.0
    %588 = vmatpush1.msra.mxu0 0.0
    %589 = vmatprep.subr.mxu0 0.0
    %590 = vmatpush1.msra.mxu0 0.0
    %591 = vmatprep.subr.mxu0 0.0
    %592 = vmatpush1.msra.mxu0 0.0
    %593 = vmatprep.subr.mxu0 0.0
    %594 = vmatpush1.msra.mxu0 0.0
    %595 = vmatprep.subr.mxu0 0.0
    %596 = vmatpush1.msra.mxu0 0.0
    %597 = vmatprep.subr.mxu0 0.0
    %598 = vmatpush1.msra.mxu0 0.0
    %599 = vmatprep.mubr.f32.mxu0 0.0
    %600 = vmatmul.mubr.f32.gmra.mrb[0].mxu0 %v391
    %v601 = vpop.f32.mrb[0].mxu0
    %v602 = vadd.f32 %v387, %v601
    %v603 = vpop.f32.mrb[0].mxu0
    %604 = vdwg.mxu0
    %vm605 = vcmp.gt.f32.partialorder %v460, 0.0
    %vm606 = vcmp.gt.f32.partialorder %v462, 0.0
    %vm607 = vcmp.gt.f32.partialorder %v531, 0.0
    %vm608 = vcmp.gt.f32.partialorder %v533, 0.0
    %vm609 = vcmp.gt.f32.partialorder %v602, 0.0
    %v610 = vmin.f32 %v460, 0.0
    %v611 = vmin.f32 %v462, 0.0
    %v612 = vmin.f32 %v531, 0.0
    %v613 = vmin.f32 %v533, 0.0
    %v614 = vmin.f32 %v602, 0.0
    %v615 = vmul.f32 %v610, 1.442695
    %v616 = vpow.pop %v615
    %v617 = vmul.f32 %v611, 1.442695
    %v618 = vpow.pop %v617
    %v619 = vmul.f32 %v612, 1.442695
    %v620 = vpow.pop %v619
    %v621 = vmul.f32 %v613, 1.442695
    %v622 = vpow.pop %v621
    %v623 = vmul.f32 %v614, 1.442695
    %v624 = vpow.pop %v623
    %v625 = vsub.f32 %v616, 1.0
    %v626 = vsub.f32 %v618, 1.0
    %v627 = vsub.f32 %v620, 1.0
    %v628 = vsub.f32 %v622, 1.0
    %v629 = vsub.f32 %v624, 1.0
    %v630 = vsel %vm605, %v460, %v625
    %v631 = vsel %vm606, %v462, %v626
    %v632 = vsel %vm607, %v531, %v627
    %v633 = vsel %vm608, %v533, %v628
    %v634 = vsel %vm609, %v602, %v629
    %v635 = vld [vmem:[%s1] sm:$0x1f]
    %v637 = vlaneseq
    %v638 = vshrl.u32 %v637, 7
    %v639 = vsub.s32 0, %v638
    %v640 = vrot.slane %v635, %v639
    %v641 = vlaneseq
    %v642 = vshrl.u32 %v641, 7
    %v643 = vsub.s32 1, %v642
    %v644 = vrot.slane %v635, %v643
    %v645 = vlaneseq
    %v646 = vshrl.u32 %v645, 7
    %v647 = vsub.s32 2, %v646
    %v648 = vrot.slane %v635, %v647
    %v649 = vlaneseq
    %v650 = vshrl.u32 %v649, 7
    %v651 = vsub.s32 3, %v650
    %v652 = vrot.slane %v635, %v651
    %v653 = vlaneseq
    %v654 = vshrl.u32 %v653, 7
    %v655 = vsub.s32 4, %v654
    %v656 = vrot.slane %v635, %v655
    %v662 = vmul.f32 %v630, %v640
    %v663 = vmul.f32 %v631, %v644
    %v664 = vmul.f32 %v632, %v648
    %v665 = vmul.f32 %v633, %v652
    %v666 = vmul.f32 %v634, %v656
    %vm667 = vcmask 1043456
    %v668 = vsel %vm667, %v662, 0.0
    %v669 = vsel %vm667, %v663, 0.0
    %v670 = vadd.f32 %v668, %v669
    %v671 = vsel %vm667, %v664, 0.0
    %v672 = vadd.f32 %v670, %v671
    %v673 = vsel %vm667, %v665, 0.0
    %v674 = vadd.f32 %v672, %v673
    %vm675 = vcmask 953344
    %v676 = vsel %vm675, %v666, 0.0
    %v677 = vadd.f32 %v674, %v676
    %678 = vadd.xlane.f32.xlu0 %v677
    %v679 = vpop.xlane.xlu0 %678
    %v680 = vmul.f32 %v679, 0.0017301039
    %v681 = vmul.f32 %v662, %v630
    %v682 = vmul.f32 %v663, %v631
    %v683 = vmul.f32 %v664, %v632
    %v684 = vmul.f32 %v665, %v633
    %v685 = vmul.f32 %v666, %v634
    %v686 = vsel %vm667, %v681, 0.0
    %v687 = vsel %vm667, %v682, 0.0
    %v688 = vadd.f32 %v686, %v687
    %v689 = vsel %vm667, %v683, 0.0
    %v690 = vadd.f32 %v688, %v689
    %v691 = vsel %vm667, %v684, 0.0
    %v692 = vadd.f32 %v690, %v691
    %v693 = vsel %vm675, %v685, 0.0
    %v694 = vadd.f32 %v692, %v693
    %695 = vadd.xlane.f32.xlu0 %v694
    %v696 = vpop.xlane.xlu0 %695
    %v697 = vmul.f32 %v696, 0.0017301039
    %v698 = vmul.f32 %v680, %v680
    %v699 = vsub.f32 %v697, %v698
    %v700 = vadd.f32 %v699, 1e-05
    %v701 = vrsqrt.pop %v700
    %v702 = vld [vmem:[%s7] sm:$0xf]
    %v703 = vmul.f32 %v702, %v701
    %v704 = vld [vmem:[%s8] sm:$0xf]
    %v705 = vmul.f32 %v680, %v703
    %v706 = vsub.f32 %v704, %v705
    %708 = vset.pattern.permute.xlu0 0
    %709 = vperm.xlu0 %708, %v703
    %v710 = vpop.permute.xlu0 %709
    %v712 = vmul.f32 %v630, %v710
    %v713 = vmul.f32 %v631, %v710
    %v714 = vmul.f32 %v632, %v710
    %v715 = vmul.f32 %v633, %v710
    %v716 = vmul.f32 %v634, %v710
    %718 = vset.pattern.permute.xlu0 0
    %719 = vperm.xlu0 %718, %v706
    %v720 = vpop.permute.xlu0 %719
    %v722 = vadd.f32 %v712, %v720
    %v723 = vadd.f32 %v713, %v720
    %v724 = vadd.f32 %v714, %v720
    %v725 = vadd.f32 %v715, %v720
    %v726 = vadd.f32 %v716, %v720
    %v730 = vrot.slane %v724, 4
    %v731 = vrot.slane %v725, 4
    %v732 = vrot.slane %v726, 4
    %733 = vrot.lane.b32.xlu0 %v730, 60
    %v734 = vpop.permute.xlu0 %733
    %735 = vrot.lane.b32.xlu0 %v731, 60
    %v736 = vpop.permute.xlu0 %735
    %737 = vrot.lane.b32.xlu0 %v732, 60
    %v738 = vpop.permute.xlu0 %737
    %vm739 = vcmask 490496
    %v740 = vsel %vm739, %v734, %v736
    %v741 = vsel %vm739, %v736, %v738
    %v745 = vsel %vm667, %v722, %v740
    %v746 = vsel %vm667, %v723, %v741
    %v747 = vsel %vm667, %v724, %v738
    %vm748 = vcmask 400384
    %v750 = vsel %vm748, %v747, 0
    %vm752 = vcmask 1040384
    %v754 = vsel %vm752, %v261, 0
    %v757 = vsel %vm752, %v262, 0
    %v760 = vsel %vm752, %v263, 0
    %762 = vmatprep.subr.mxu0 %v148
    %763 = vmatpush1.msra.mxu0 %v147
    %764 = vmatprep.subr.mxu0 %v151
    %765 = vmatpush1.msra.mxu0 %v150
    %766 = vmatprep.subr.mxu0 %v154
    %767 = vmatpush1.msra.mxu0 %v153
    %768 = vmatprep.subr.mxu0 %v157
    %769 = vmatpush1.msra.mxu0 %v156
    %770 = vmatprep.subr.mxu0 %v160
    %771 = vmatpush1.msra.mxu0 %v159
    %772 = vmatprep.subr.mxu0 %v163
    %773 = vmatpush1.msra.mxu0 %v162
    %774 = vmatprep.subr.mxu0 %v166
    %775 = vmatpush1.msra.mxu0 %v165
    %776 = vmatprep.subr.mxu0 %v169
    %777 = vmatpush1.msra.mxu0 %v168
    %778 = vmatprep.subr.mxu0 %v172
    %779 = vmatpush1.msra.mxu0 %v171
    %780 = vmatprep.subr.mxu0 %v175
    %781 = vmatpush1.msra.mxu0 %v174
    %782 = vmatprep.subr.mxu0 %v178
    %783 = vmatpush1.msra.mxu0 %v177
    %784 = vmatprep.subr.mxu0 %v181
    %785 = vmatpush1.msra.mxu0 %v180
    %786 = vmatprep.subr.mxu0 %v184
    %787 = vmatpush1.msra.mxu0 %v183
    %788 = vmatprep.subr.mxu0 %v187
    %789 = vmatpush1.msra.mxu0 %v186
    %790 = vmatprep.subr.mxu0 %v190
    %791 = vmatpush1.msra.mxu0 %v189
    %792 = vmatprep.subr.mxu0 %v193
    %793 = vmatpush1.msra.mxu0 %v192
    %794 = vmatprep.subr.mxu0 %v196
    %795 = vmatpush1.msra.mxu0 %v195
    %796 = vmatprep.subr.mxu0 %v199
    %797 = vmatpush1.msra.mxu0 %v198
    %798 = vmatprep.subr.mxu0 %v202
    %799 = vmatpush1.msra.mxu0 %v201
    %800 = vmatprep.subr.mxu0 %v205
    %801 = vmatpush1.msra.mxu0 %v204
    %802 = vmatprep.subr.mxu0 %v208
    %803 = vmatpush1.msra.mxu0 %v207
    %804 = vmatprep.subr.mxu0 %v211
    %805 = vmatpush1.msra.mxu0 %v210
    %806 = vmatprep.subr.mxu0 %v214
    %807 = vmatpush1.msra.mxu0 %v213
    %808 = vmatprep.subr.mxu0 %v217
    %809 = vmatpush1.msra.mxu0 %v216
    %810 = vmatprep.subr.mxu0 %v220
    %811 = vmatpush1.msra.mxu0 %v219
    %812 = vmatprep.subr.mxu0 %v223
    %813 = vmatpush1.msra.mxu0 %v222
    %814 = vmatprep.subr.mxu0 %v226
    %815 = vmatpush1.msra.mxu0 %v225
    %816 = vmatprep.subr.mxu0 %v229
    %817 = vmatpush1.msra.mxu0 %v228
    %818 = vmatprep.subr.mxu0 %v232
    %819 = vmatpush1.msra.mxu0 %v231
    %820 = vmatprep.subr.mxu0 %v235
    %821 = vmatpush1.msra.mxu0 %v234
    %822 = vmatprep.subr.mxu0 %v238
    %823 = vmatpush1.msra.mxu0 %v237
    %824 = vmatprep.subr.mxu0 %v241
    %825 = vmatpush1.msra.mxu0 %v240
    %826 = vmatprep.mubr.f32.mxu0 %v746
    %827 = vmatmul.mubr.f32.gmra.mrb[0].mxu0 %v745
    %v828 = vpop.f32.mrb[0].mxu0
    %v829 = vadd.f32 0.0, %v828
    %v830 = vpop.f32.mrb[0].mxu0
    %v831 = vadd.f32 0.0, %v830
    %832 = vdwg.mxu0
    %833 = vmatprep.subr.mxu0 %v244
    %834 = vmatpush1.msra.mxu0 %v243
    %835 = vmatprep.subr.mxu0 %v247
    %836 = vmatpush1.msra.mxu0 %v246
    %837 = vmatprep.subr.mxu0 %v250
    %838 = vmatpush1.msra.mxu0 %v249
    %839 = vmatprep.subr.mxu0 %v253
    %840 = vmatpush1.msra.mxu0 %v252
    %841 = vmatprep.subr.mxu0 %v256
    %842 = vmatpush1.msra.mxu0 %v255
    %843 = vmatprep.subr.mxu0 %v259
    %844 = vmatpush1.msra.mxu0 %v258
    %845 = vmatprep.subr.mxu0 %v757
    %846 = vmatpush1.msra.mxu0 %v754
    %847 = vmatprep.subr.mxu0 0.0
    %848 = vmatpush1.msra.mxu0 0.0
    %849 = vmatprep.subr.mxu0 0.0
    %850 = vmatpush1.msra.mxu0 0.0
    %851 = vmatprep.subr.mxu0 0.0
    %852 = vmatpush1.msra.mxu0 0.0
    %853 = vmatprep.subr.mxu0 0.0
    %854 = vmatpush1.msra.mxu0 0.0
    %855 = vmatprep.subr.mxu0 0.0
    %856 = vmatpush1.msra.mxu0 0.0
    %857 = vmatprep.subr.mxu0 0.0
    %858 = vmatpush1.msra.mxu0 0.0
    %859 = vmatprep.subr.mxu0 0.0
    %860 = vmatpush1.msra.mxu0 0.0
    %861 = vmatprep.subr.mxu0 0.0
    %862 = vmatpush1.msra.mxu0 0.0
    %863 = vmatprep.subr.mxu0 0.0
    %864 = vmatpush1.msra.mxu0 0.0
    %865 = vmatprep.subr.mxu0 0.0
    %866 = vmatpush1.msra.mxu0 0.0
    %867 = vmatprep.subr.mxu0 0.0
    %868 = vmatpush1.msra.mxu0 0.0
    %869 = vmatprep.subr.mxu0 0.0
    %870 = vmatpush1.msra.mxu0 0.0
    %871 = vmatprep.subr.mxu0 0.0
    %872 = vmatpush1.msra.mxu0 0.0
    %873 = vmatprep.subr.mxu0 0.0
    %874 = vmatpush1.msra.mxu0 0.0
    %875 = vmatprep.subr.mxu0 0.0
    %876 = vmatpush1.msra.mxu0 0.0
    %877 = vmatprep.subr.mxu0 0.0
    %878 = vmatpush1.msra.mxu0 0.0
    %879 = vmatprep.subr.mxu0 0.0
    %880 = vmatpush1.msra.mxu0 0.0
    %881 = vmatprep.subr.mxu0 0.0
    %882 = vmatpush1.msra.mxu0 0.0
    %883 = vmatprep.subr.mxu0 0.0
    %884 = vmatpush1.msra.mxu0 0.0
    %885 = vmatprep.subr.mxu0 0.0
    %886 = vmatpush1.msra.mxu0 0.0
    %887 = vmatprep.subr.mxu0 0.0
    %888 = vmatpush1.msra.mxu0 0.0
    %889 = vmatprep.subr.mxu0 0.0
    %890 = vmatpush1.msra.mxu0 0.0
    %891 = vmatprep.subr.mxu0 0.0
    %892 = vmatpush1.msra.mxu0 0.0
    %893 = vmatprep.subr.mxu0 0.0
    %894 = vmatpush1.msra.mxu0 0.0
    %895 = vmatprep.subr.mxu0 0.0
    %896 = vmatpush1.msra.mxu0 0.0
    %897 = vmatprep.mubr.f32.mxu0 0.0
    %898 = vmatmul.mubr.f32.gmra.mrb[0].mxu0 %v750
    %v899 = vpop.f32.mrb[0].mxu0
    %v900 = vadd.f32 %v829, %v899
    %v901 = vpop.f32.mrb[0].mxu0
    %v902 = vadd.f32 %v831, %v901
    %903 = vdwg.mxu0
    %904 = vmatprep.subr.mxu0 0.0
    %905 = vmatpush1.msra.mxu0 %v149
    %906 = vmatprep.subr.mxu0 0.0
    %907 = vmatpush1.msra.mxu0 %v152
    %908 = vmatprep.subr.mxu0 0.0
    %909 = vmatpush1.msra.mxu0 %v155
    %910 = vmatprep.subr.mxu0 0.0
    %911 = vmatpush1.msra.mxu0 %v158
    %912 = vmatprep.subr.mxu0 0.0
    %913 = vmatpush1.msra.mxu0 %v161
    %914 = vmatprep.subr.mxu0 0.0
    %915 = vmatpush1.msra.mxu0 %v164
    %916 = vmatprep.subr.mxu0 0.0
    %917 = vmatpush1.msra.mxu0 %v167
    %918 = vmatprep.subr.mxu0 0.0
    %919 = vmatpush1.msra.mxu0 %v170
    %920 = vmatprep.subr.mxu0 0.0
    %921 = vmatpush1.msra.mxu0 %v173
    %922 = vmatprep.subr.mxu0 0.0
    %923 = vmatpush1.msra.mxu0 %v176
    %924 = vmatprep.subr.mxu0 0.0
    %925 = vmatpush1.msra.mxu0 %v179
    %926 = vmatprep.subr.mxu0 0.0
    %927 = vmatpush1.msra.mxu0 %v182
    %928 = vmatprep.subr.mxu0 0.0
    %929 = vmatpush1.msra.mxu0 %v185
    %930 = vmatprep.subr.mxu0 0.0
    %931 = vmatpush1.msra.mxu0 %v188
    %932 = vmatprep.subr.mxu0 0.0
    %933 = vmatpush1.msra.mxu0 %v191
    %934 = vmatprep.subr.mxu0 0.0
    %935 = vmatpush1.msra.mxu0 %v194
    %936 = vmatprep.subr.mxu0 0.0
    %937 = vmatpush1.msra.mxu0 %v197
    %938 = vmatprep.subr.mxu0 0.0
    %939 = vmatpush1.msra.mxu0 %v200
    %940 = vmatprep.subr.mxu0 0.0
    %941 = vmatpush1.msra.mxu0 %v203
    %942 = vmatprep.subr.mxu0 0.0
    %943 = vmatpush1.msra.mxu0 %v206
    %944 = vmatprep.subr.mxu0 0.0
    %945 = vmatpush1.msra.mxu0 %v209
    %946 = vmatprep.subr.mxu0 0.0
    %947 = vmatpush1.msra.mxu0 %v212
    %948 = vmatprep.subr.mxu0 0.0
    %949 = vmatpush1.msra.mxu0 %v215
    %950 = vmatprep.subr.mxu0 0.0
    %951 = vmatpush1.msra.mxu0 %v218
    %952 = vmatprep.subr.mxu0 0.0
    %953 = vmatpush1.msra.mxu0 %v221
    %954 = vmatprep.subr.mxu0 0.0
    %955 = vmatpush1.msra.mxu0 %v224
    %956 = vmatprep.subr.mxu0 0.0
    %957 = vmatpush1.msra.mxu0 %v227
    %958 = vmatprep.subr.mxu0 0.0
    %959 = vmatpush1.msra.mxu0 %v230
    %960 = vmatprep.subr.mxu0 0.0
    %961 = vmatpush1.msra.mxu0 %v233
    %962 = vmatprep.subr.mxu0 0.0
    %963 = vmatpush1.msra.mxu0 %v236
    %964 = vmatprep.subr.mxu0 0.0
    %965 = vmatpush1.msra.mxu0 %v239
    %966 = vmatprep.subr.mxu0 0.0
    %967 = vmatpush1.msra.mxu0 %v242
    %968 = vmatprep.mubr.f32.mxu0 %v746
    %969 = vmatmul.mubr.f32.gmra.mrb[0].mxu0 %v745
    %v970 = vpop.f32.mrb[0].mxu0
    %v971 = vadd.f32 0.0, %v970
    %v972 = vpop.f32.mrb[0].mxu0
    %973 = vdwg.mxu0
    %974 = vmatprep.subr.mxu0 0.0
    %975 = vmatpush1.msra.mxu0 %v245
    %976 = vmatprep.subr.mxu0 0.0
    %977 = vmatpush1.msra.mxu0 %v248
    %978 = vmatprep.subr.mxu0 0.0
    %979 = vmatpush1.msra.mxu0 %v251
    %980 = vmatprep.subr.mxu0 0.0
    %981 = vmatpush1.msra.mxu0 %v254
    %982 = vmatprep.subr.mxu0 0.0
    %983 = vmatpush1.msra.mxu0 %v257
    %984 = vmatprep.subr.mxu0 0.0
    %985 = vmatpush1.msra.mxu0 %v260
    %986 = vmatprep.subr.mxu0 0.0
    %987 = vmatpush1.msra.mxu0 %v760
    %988 = vmatprep.subr.mxu0 0.0
    %989 = vmatpush1.msra.mxu0 0.0
    %990 = vmatprep.subr.mxu0 0.0
    %991 = vmatpush1.msra.mxu0 0.0
    %992 = vmatprep.subr.mxu0 0.0
    %993 = vmatpush1.msra.mxu0 0.0
    %994 = vmatprep.subr.mxu0 0.0
    %995 = vmatpush1.msra.mxu0 0.0
    %996 = vmatprep.subr.mxu0 0.0
    %997 = vmatpush1.msra.mxu0 0.0
    %998 = vmatprep.subr.mxu0 0.0
    %999 = vmatpush1.msra.mxu0 0.0
    %1000 = vmatprep.subr.mxu0 0.0
    %1001 = vmatpush1.msra.mxu0 0.0
    %1002 = vmatprep.subr.mxu0 0.0
    %1003 = vmatpush1.msra.mxu0 0.0
    %1004 = vmatprep.subr.mxu0 0.0
    %1005 = vmatpush1.msra.mxu0 0.0
    %1006 = vmatprep.subr.mxu0 0.0
    %1007 = vmatpush1.msra.mxu0 0.0
    %1008 = vmatprep.subr.mxu0 0.0
    %1009 = vmatpush1.msra.mxu0 0.0
    %1010 = vmatprep.subr.mxu0 0.0
    %1011 = vmatpush1.msra.mxu0 0.0
    %1012 = vmatprep.subr.mxu0 0.0
    %1013 = vmatpush1.msra.mxu0 0.0
    %1014 = vmatprep.subr.mxu0 0.0
    %1015 = vmatpush1.msra.mxu0 0.0
    %1016 = vmatprep.subr.mxu0 0.0
    %1017 = vmatpush1.msra.mxu0 0.0
    %1018 = vmatprep.subr.mxu0 0.0
    %1019 = vmatpush1.msra.mxu0 0.0
    %1020 = vmatprep.subr.mxu0 0.0
    %1021 = vmatpush1.msra.mxu0 0.0
    %1022 = vmatprep.subr.mxu0 0.0
    %1023 = vmatpush1.msra.mxu0 0.0
    %1024 = vmatprep.subr.mxu0 0.0
    %1025 = vmatpush1.msra.mxu0 0.0
    %1026 = vmatprep.subr.mxu0 0.0
    %1027 = vmatpush1.msra.mxu0 0.0
    %1028 = vmatprep.subr.mxu0 0.0
    %1029 = vmatpush1.msra.mxu0 0.0
    %1030 = vmatprep.subr.mxu0 0.0
    %1031 = vmatpush1.msra.mxu0 0.0
    %1032 = vmatprep.subr.mxu0 0.0
    %1033 = vmatpush1.msra.mxu0 0.0
    %1034 = vmatprep.subr.mxu0 0.0
    %1035 = vmatpush1.msra.mxu0 0.0
    %1036 = vmatprep.subr.mxu0 0.0
    %1037 = vmatpush1.msra.mxu0 0.0
    %1038 = vmatprep.mubr.f32.mxu0 0.0
    %1039 = vmatmul.mubr.f32.gmra.mrb[0].mxu0 %v750
    %v1040 = vpop.f32.mrb[0].mxu0
    %v1041 = vadd.f32 %v971, %v1040
    %v1042 = vpop.f32.mrb[0].mxu0
    %1043 = vdwg.mxu0
    %v1047 = vrot.slane %v900, 4
    %v1048 = vrot.slane %v902, 4
    %v1049 = vrot.slane %v1041, 4
    %1050 = vrot.lane.b32.xlu0 %v1047, 105
    %v1051 = vpop.permute.xlu0 %1050
    %1052 = vrot.lane.b32.xlu0 %v1048, 105
    %v1053 = vpop.permute.xlu0 %1052
    %1054 = vrot.lane.b32.xlu0 %v1049, 105
    %v1055 = vpop.permute.xlu0 %1054
    %vm1056 = vcmask 859136
    %v1057 = vsel %vm1056, %v1051, %v1053
    %v1058 = vsel %vm1056, %v1053, %v1055
    %v1063 = vsel %vm1056, %v1041, %v1051
    %v1064 = vld [vmem:[%s9] sm:$0xff]
    %v1066 = vrot.slane %v1063, 4
    %v1067 = vrot.slane %v1057, 4
    %v1068 = vrot.slane %v1058, 4
    %v1069 = vrot.slane %v1055, 4
    %1070 = vrot.lane.b32.xlu0 %v1047, 127
    %v1071 = vpop.permute.xlu0 %1070
    %1072 = vrot.lane.b32.xlu0 %v1048, 127
    %v1073 = vpop.permute.xlu0 %1072
    %1074 = vrot.lane.b32.xlu0 %v1066, 127
    %v1075 = vpop.permute.xlu0 %1074
    %1076 = vrot.lane.b32.xlu0 %v1067, 127
    %v1077 = vpop.permute.xlu0 %1076
    %1078 = vrot.lane.b32.xlu0 %v1068, 127
    %v1079 = vpop.permute.xlu0 %1078
    %1080 = vrot.lane.b32.xlu0 %v1069, 127
    %v1081 = vpop.permute.xlu0 %1080
    %vm1082 = vcmask 1039360
    %v1083 = vsel %vm1082, %v1071, %v1073
    %v1084 = vsel %vm1082, %v1073, %v1075
    %v1085 = vsel %vm1082, %v1075, %v1077
    %v1086 = vsel %vm1082, %v1077, %v1079
    %v1087 = vsel %vm1082, %v1079, %v1081
    %1094 = vrot.lane.b32.xlu0 %v900, 109
    %v1095 = vpop.permute.xlu0 %1094
    %1096 = vrot.lane.b32.xlu0 %v902, 109
    %v1097 = vpop.permute.xlu0 %1096
    %1098 = vrot.lane.b32.xlu0 %v1063, 109
    %v1099 = vpop.permute.xlu0 %1098
    %1100 = vrot.lane.b32.xlu0 %v1057, 109
    %v1101 = vpop.permute.xlu0 %1100
    %1102 = vrot.lane.b32.xlu0 %v1058, 109
    %v1103 = vpop.permute.xlu0 %1102
    %1104 = vrot.lane.b32.xlu0 %v1055, 109
    %v1105 = vpop.permute.xlu0 %1104
    %vm1106 = vcmask 891904
    %v1107 = vsel %vm1106, %v1095, %v1097
    %v1108 = vsel %vm1106, %v1097, %v1099
    %v1109 = vsel %vm1106, %v1099, %v1101
    %v1110 = vsel %vm1106, %v1101, %v1103
    %v1111 = vsel %vm1106, %v1103, %v1105
    %1118 = vrot.lane.b32.xlu0 %v1047, 108
    %v1119 = vpop.permute.xlu0 %1118
    %1120 = vrot.lane.b32.xlu0 %v1048, 108
    %v1121 = vpop.permute.xlu0 %1120
    %1122 = vrot.lane.b32.xlu0 %v1066, 108
    %v1123 = vpop.permute.xlu0 %1122
    %1124 = vrot.lane.b32.xlu0 %v1067, 108
    %v1125 = vpop.permute.xlu0 %1124
    %1126 = vrot.lane.b32.xlu0 %v1068, 108
    %v1127 = vpop.permute.xlu0 %1126
    %1128 = vrot.lane.b32.xlu0 %v1069, 108
    %v1129 = vpop.permute.xlu0 %1128
    %vm1130 = vcmask 883712
    %v1131 = vsel %vm1130, %v1119, %v1121
    %v1132 = vsel %vm1130, %v1121, %v1123
    %v1133 = vsel %vm1130, %v1123, %v1125
    %v1134 = vsel %vm1130, %v1125, %v1127
    %v1135 = vsel %vm1130, %v1127, %v1129
    %v1142 = vsel %vm667, %v900, %v1083
    %v1143 = vsel %vm667, %v902, %v1084
    %v1144 = vsel %vm667, %v1063, %v1085
    %v1145 = vsel %vm667, %v1057, %v1086
    %v1146 = vsel %vm667, %v1058, %v1087
    %v1147 = vsel %vm667, %v1055, %v1081
    %v1148 = vsel %vm667, %v1107, %v1131
    %v1149 = vsel %vm667, %v1108, %v1132
    %v1150 = vsel %vm667, %v1109, %v1133
    %v1151 = vsel %vm667, %v1110, %v1134
    %v1152 = vsel %vm667, %v1111, %v1135
    %v1153 = vsel %vm667, %v1105, %v1129
    %v1154 = vld [vmem:[%s10] sm:$0xff]
    %1156 = vset.pattern.permute.xlu0 0
    %1157 = vperm.xlu0 %1156, %v1154
    %v1158 = vpop.permute.xlu0 %1157
    %v1161 = vsel %vm389, %v1064, 0
    %1163 = vmatprep.subr.mxu0 %v1143
    %1164 = vmatpush1.msra.mxu0 %v1142
    %1165 = vmatprep.subr.mxu0 %v1149
    %1166 = vmatpush1.msra.mxu0 %v1148
    %1167 = vmatprep.subr.mxu0 0.0
    %1168 = vmatpush1.msra.mxu0 0.0
    %1169 = vmatprep.subr.mxu0 0.0
    %1170 = vmatpush1.msra.mxu0 0.0
    %1171 = vmatprep.subr.mxu0 0.0
    %1172 = vmatpush1.msra.mxu0 0.0
    %1173 = vmatprep.subr.mxu0 0.0
    %1174 = vmatpush1.msra.mxu0 0.0
    %1175 = vmatprep.subr.mxu0 0.0
    %1176 = vmatpush1.msra.mxu0 0.0
    %1177 = vmatprep.subr.mxu0 0.0
    %1178 = vmatpush1.msra.mxu0 0.0
    %1179 = vmatprep.subr.mxu0 0.0
    %1180 = vmatpush1.msra.mxu0 0.0
    %1181 = vmatprep.subr.mxu0 0.0
    %1182 = vmatpush1.msra.mxu0 0.0
    %1183 = vmatprep.subr.mxu0 0.0
    %1184 = vmatpush1.msra.mxu0 0.0
    %1185 = vmatprep.subr.mxu0 0.0
    %1186 = vmatpush1.msra.mxu0 0.0
    %1187 = vmatprep.subr.mxu0 0.0
    %1188 = vmatpush1.msra.mxu0 0.0
    %1189 = vmatprep.subr.mxu0 0.0
    %1190 = vmatpush1.msra.mxu0 0.0
    %1191 = vmatprep.subr.mxu0 0.0
    %1192 = vmatpush1.msra.mxu0 0.0
    %1193 = vmatprep.subr.mxu0 0.0
    %1194 = vmatpush1.msra.mxu0 0.0
    %1195 = vmatprep.subr.mxu0 0.0
    %1196 = vmatpush1.msra.mxu0 0.0
    %1197 = vmatprep.subr.mxu0 0.0
    %1198 = vmatpush1.msra.mxu0 0.0
    %1199 = vmatprep.subr.mxu0 0.0
    %1200 = vmatpush1.msra.mxu0 0.0
    %1201 = vmatprep.subr.mxu0 0.0
    %1202 = vmatpush1.msra.mxu0 0.0
    %1203 = vmatprep.subr.mxu0 0.0
    %1204 = vmatpush1.msra.mxu0 0.0
    %1205 = vmatprep.subr.mxu0 0.0
    %1206 = vmatpush1.msra.mxu0 0.0
    %1207 = vmatprep.subr.mxu0 0.0
    %1208 = vmatpush1.msra.mxu0 0.0
    %1209 = vmatprep.subr.mxu0 0.0
    %1210 = vmatpush1.msra.mxu0 0.0
    %1211 = vmatprep.subr.mxu0 0.0
    %1212 = vmatpush1.msra.mxu0 0.0
    %1213 = vmatprep.subr.mxu0 0.0
    %1214 = vmatpush1.msra.mxu0 0.0
    %1215 = vmatprep.subr.mxu0 0.0
    %1216 = vmatpush1.msra.mxu0 0.0
    %1217 = vmatprep.subr.mxu0 0.0
    %1218 = vmatpush1.msra.mxu0 0.0
    %1219 = vmatprep.subr.mxu0 0.0
    %1220 = vmatpush1.msra.mxu0 0.0
    %1221 = vmatprep.subr.mxu0 0.0
    %1222 = vmatpush1.msra.mxu0 0.0
    %1223 = vmatprep.subr.mxu0 0.0
    %1224 = vmatpush1.msra.mxu0 0.0
    %1225 = vmatprep.subr.mxu0 0.0
    %1226 = vmatpush1.msra.mxu0 0.0
    %1227 = vmatprep.mubr.f32.mxu0 0.0
    %1228 = vmatmul.mubr.f32.gmra.mrb[0].mxu0 %v1161
    %v1229 = vpop.f32.mrb[0].mxu0
    %v1230 = vadd.f32 %v1158, %v1229
    %v1231 = vpop.f32.mrb[0].mxu0
    %v1232 = vadd.f32 %v1158, %v1231
    %1233 = vdwg.mxu0
    %1234 = vmatprep.subr.mxu0 %v1145
    %1235 = vmatpush1.msra.mxu0 %v1144
    %1236 = vmatprep.subr.mxu0 %v1151
    %1237 = vmatpush1.msra.mxu0 %v1150
    %1238 = vmatprep.subr.mxu0 0.0
    %1239 = vmatpush1.msra.mxu0 0.0
    %1240 = vmatprep.subr.mxu0 0.0
    %1241 = vmatpush1.msra.mxu0 0.0
    %1242 = vmatprep.subr.mxu0 0.0
    %1243 = vmatpush1.msra.mxu0 0.0
    %1244 = vmatprep.subr.mxu0 0.0
    %1245 = vmatpush1.msra.mxu0 0.0
    %1246 = vmatprep.subr.mxu0 0.0
    %1247 = vmatpush1.msra.mxu0 0.0
    %1248 = vmatprep.subr.mxu0 0.0
    %1249 = vmatpush1.msra.mxu0 0.0
    %1250 = vmatprep.subr.mxu0 0.0
    %1251 = vmatpush1.msra.mxu0 0.0
    %1252 = vmatprep.subr.mxu0 0.0
    %1253 = vmatpush1.msra.mxu0 0.0
    %1254 = vmatprep.subr.mxu0 0.0
    %1255 = vmatpush1.msra.mxu0 0.0
    %1256 = vmatprep.subr.mxu0 0.0
    %1257 = vmatpush1.msra.mxu0 0.0
    %1258 = vmatprep.subr.mxu0 0.0
    %1259 = vmatpush1.msra.mxu0 0.0
    %1260 = vmatprep.subr.mxu0 0.0
    %1261 = vmatpush1.msra.mxu0 0.0
    %1262 = vmatprep.subr.mxu0 0.0
    %1263 = vmatpush1.msra.mxu0 0.0
    %1264 = vmatprep.subr.mxu0 0.0
    %1265 = vmatpush1.msra.mxu0 0.0
    %1266 = vmatprep.subr.mxu0 0.0
    %1267 = vmatpush1.msra.mxu0 0.0
    %1268 = vmatprep.subr.mxu0 0.0
    %1269 = vmatpush1.msra.mxu0 0.0
    %1270 = vmatprep.subr.mxu0 0.0
    %1271 = vmatpush1.msra.mxu0 0.0
    %1272 = vmatprep.subr.mxu0 0.0
    %1273 = vmatpush1.msra.mxu0 0.0
    %1274 = vmatprep.subr.mxu0 0.0
    %1275 = vmatpush1.msra.mxu0 0.0
    %1276 = vmatprep.subr.mxu0 0.0
    %1277 = vmatpush1.msra.mxu0 0.0
    %1278 = vmatprep.subr.mxu0 0.0
    %1279 = vmatpush1.msra.mxu0 0.0
    %1280 = vmatprep.subr.mxu0 0.0
    %1281 = vmatpush1.msra.mxu0 0.0
    %1282 = vmatprep.subr.mxu0 0.0
    %1283 = vmatpush1.msra.mxu0 0.0
    %1284 = vmatprep.subr.mxu0 0.0
    %1285 = vmatpush1.msra.mxu0 0.0
    %1286 = vmatprep.subr.mxu0 0.0
    %1287 = vmatpush1.msra.mxu0 0.0
    %1288 = vmatprep.subr.mxu0 0.0
    %1289 = vmatpush1.msra.mxu0 0.0
    %1290 = vmatprep.subr.mxu0 0.0
    %1291 = vmatpush1.msra.mxu0 0.0
    %1292 = vmatprep.subr.mxu0 0.0
    %1293 = vmatpush1.msra.mxu0 0.0
    %1294 = vmatprep.subr.mxu0 0.0
    %1295 = vmatpush1.msra.mxu0 0.0
    %1296 = vmatprep.subr.mxu0 0.0
    %1297 = vmatpush1.msra.mxu0 0.0
    %1298 = vmatprep.mubr.f32.mxu0 0.0
    %1299 = vmatmul.mubr.f32.gmra.mrb[0].mxu0 %v1161
    %v1300 = vpop.f32.mrb[0].mxu0
    %v1301 = vadd.f32 %v1158, %v1300
    %v1302 = vpop.f32.mrb[0].mxu0
    %v1303 = vadd.f32 %v1158, %v1302
    %1304 = vdwg.mxu0
    %1305 = vmatprep.subr.mxu0 %v1147
    %1306 = vmatpush1.msra.mxu0 %v1146
    %1307 = vmatprep.subr.mxu0 %v1153
    %1308 = vmatpush1.msra.mxu0 %v1152
    %1309 = vmatprep.subr.mxu0 0.0
    %1310 = vmatpush1.msra.mxu0 0.0
    %1311 = vmatprep.subr.mxu0 0.0
    %1312 = vmatpush1.msra.mxu0 0.0
    %1313 = vmatprep.subr.mxu0 0.0
    %1314 = vmatpush1.msra.mxu0 0.0
    %1315 = vmatprep.subr.mxu0 0.0
    %1316 = vmatpush1.msra.mxu0 0.0
    %1317 = vmatprep.subr.mxu0 0.0
    %1318 = vmatpush1.msra.mxu0 0.0
    %1319 = vmatprep.subr.mxu0 0.0
    %1320 = vmatpush1.msra.mxu0 0.0
    %1321 = vmatprep.subr.mxu0 0.0
    %1322 = vmatpush1.msra.mxu0 0.0
    %1323 = vmatprep.subr.mxu0 0.0
    %1324 = vmatpush1.msra.mxu0 0.0
    %1325 = vmatprep.subr.mxu0 0.0
    %1326 = vmatpush1.msra.mxu0 0.0
    %1327 = vmatprep.subr.mxu0 0.0
    %1328 = vmatpush1.msra.mxu0 0.0
    %1329 = vmatprep.subr.mxu0 0.0
    %1330 = vmatpush1.msra.mxu0 0.0
    %1331 = vmatprep.subr.mxu0 0.0
    %1332 = vmatpush1.msra.mxu0 0.0
    %1333 = vmatprep.subr.mxu0 0.0
    %1334 = vmatpush1.msra.mxu0 0.0
    %1335 = vmatprep.subr.mxu0 0.0
    %1336 = vmatpush1.msra.mxu0 0.0
    %1337 = vmatprep.subr.mxu0 0.0
    %1338 = vmatpush1.msra.mxu0 0.0
    %1339 = vmatprep.subr.mxu0 0.0
    %1340 = vmatpush1.msra.mxu0 0.0
    %1341 = vmatprep.subr.mxu0 0.0
    %1342 = vmatpush1.msra.mxu0 0.0
    %1343 = vmatprep.subr.mxu0 0.0
    %1344 = vmatpush1.msra.mxu0 0.0
    %1345 = vmatprep.subr.mxu0 0.0
    %1346 = vmatpush1.msra.mxu0 0.0
    %1347 = vmatprep.subr.mxu0 0.0
    %1348 = vmatpush1.msra.mxu0 0.0
    %1349 = vmatprep.subr.mxu0 0.0
    %1350 = vmatpush1.msra.mxu0 0.0
    %1351 = vmatprep.subr.mxu0 0.0
    %1352 = vmatpush1.msra.mxu0 0.0
    %1353 = vmatprep.subr.mxu0 0.0
    %1354 = vmatpush1.msra.mxu0 0.0
    %1355 = vmatprep.subr.mxu0 0.0
    %1356 = vmatpush1.msra.mxu0 0.0
    %1357 = vmatprep.subr.mxu0 0.0
    %1358 = vmatpush1.msra.mxu0 0.0
    %1359 = vmatprep.subr.mxu0 0.0
    %1360 = vmatpush1.msra.mxu0 0.0
    %1361 = vmatprep.subr.mxu0 0.0
    %1362 = vmatpush1.msra.mxu0 0.0
    %1363 = vmatprep.subr.mxu0 0.0
    %1364 = vmatpush1.msra.mxu0 0.0
    %1365 = vmatprep.subr.mxu0 0.0
    %1366 = vmatpush1.msra.mxu0 0.0
    %1367 = vmatprep.subr.mxu0 0.0
    %1368 = vmatpush1.msra.mxu0 0.0
    %1369 = vmatprep.mubr.f32.mxu0 0.0
    %1370 = vmatmul.mubr.f32.gmra.mrb[0].mxu0 %v1161
    %v1371 = vpop.f32.mrb[0].mxu0
    %v1372 = vadd.f32 %v1158, %v1371
    %v1373 = vpop.f32.mrb[0].mxu0
    %v1374 = vadd.f32 %v1158, %v1373
    %1375 = vdwg.mxu0
    %vm1376 = vcmp.gt.f32.partialorder %v1230, 0.0
    %vm1377 = vcmp.gt.f32.partialorder %v1232, 0.0
    %vm1378 = vcmp.gt.f32.partialorder %v1301, 0.0
    %vm1379 = vcmp.gt.f32.partialorder %v1303, 0.0
    %vm1380 = vcmp.gt.f32.partialorder %v1372, 0.0
    %vm1381 = vcmp.gt.f32.partialorder %v1374, 0.0
    %v1382 = vmin.f32 %v1230, 0.0
    %v1383 = vmin.f32 %v1232, 0.0
    %v1384 = vmin.f32 %v1301, 0.0
    %v1385 = vmin.f32 %v1303, 0.0
    %v1386 = vmin.f32 %v1372, 0.0
    %v1387 = vmin.f32 %v1374, 0.0
    %v1388 = vmul.f32 %v1382, 1.442695
    %v1389 = vpow.pop %v1388
    %v1390 = vmul.f32 %v1383, 1.442695
    %v1391 = vpow.pop %v1390
    %v1392 = vmul.f32 %v1384, 1.442695
    %v1393 = vpow.pop %v1392
    %v1394 = vmul.f32 %v1385, 1.442695
    %v1395 = vpow.pop %v1394
    %v1396 = vmul.f32 %v1386, 1.442695
    %v1397 = vpow.pop %v1396
    %v1398 = vmul.f32 %v1387, 1.442695
    %v1399 = vpow.pop %v1398
    %v1400 = vsub.f32 %v1389, 1.0
    %v1401 = vsub.f32 %v1391, 1.0
    %v1402 = vsub.f32 %v1393, 1.0
    %v1403 = vsub.f32 %v1395, 1.0
    %v1404 = vsub.f32 %v1397, 1.0
    %v1405 = vsub.f32 %v1399, 1.0
    %v1406 = vsel %vm1376, %v1230, %v1400
    %v1407 = vsel %vm1377, %v1232, %v1401
    %v1408 = vsel %vm1378, %v1301, %v1402
    %v1409 = vsel %vm1379, %v1303, %v1403
    %v1410 = vsel %vm1380, %v1372, %v1404
    %v1411 = vsel %vm1381, %v1374, %v1405
    %1418 = vrot.lane.b32.xlu0 %v1406, 109
    %v1419 = vpop.permute.xlu0 %1418
    %1420 = vrot.lane.b32.xlu0 %v1407, 109
    %v1421 = vpop.permute.xlu0 %1420
    %1422 = vrot.lane.b32.xlu0 %v1408, 109
    %v1423 = vpop.permute.xlu0 %1422
    %1424 = vrot.lane.b32.xlu0 %v1409, 109
    %v1425 = vpop.permute.xlu0 %1424
    %1426 = vrot.lane.b32.xlu0 %v1410, 109
    %v1427 = vpop.permute.xlu0 %1426
    %1428 = vrot.lane.b32.xlu0 %v1411, 109
    %v1429 = vpop.permute.xlu0 %1428
    %v1430 = vsel %vm1106, %v1419, %v1421
    %v1431 = vsel %vm1106, %v1421, %v1423
    %v1432 = vsel %vm1106, %v1423, %v1425
    %v1433 = vsel %vm1106, %v1425, %v1427
    %v1434 = vsel %vm1106, %v1427, %v1429
    %v1441 = vmax.f32 %v1406, %v1430
    %v1442 = vmax.f32 %v1407, %v1431
    %v1443 = vmax.f32 %v1408, %v1432
    %v1444 = vmax.f32 %v1409, %v1433
    %v1445 = vmax.f32 %v1410, %v1434
    %v1446 = vmax.f32 %v1411, %v1429
    %1453 = vrot.lane.b32.xlu0 %v1441, 127
    %v1454 = vpop.permute.xlu0 %1453
    %1455 = vrot.lane.b32.xlu0 %v1442, 127
    %v1456 = vpop.permute.xlu0 %1455
    %1457 = vrot.lane.b32.xlu0 %v1443, 127
    %v1458 = vpop.permute.xlu0 %1457
    %1459 = vrot.lane.b32.xlu0 %v1444, 127
    %v1460 = vpop.permute.xlu0 %1459
    %1461 = vrot.lane.b32.xlu0 %v1445, 127
    %v1462 = vpop.permute.xlu0 %1461
    %1463 = vrot.lane.b32.xlu0 %v1446, 127
    %v1464 = vpop.permute.xlu0 %1463
    %v1465 = vsel %vm1082, %v1454, %v1456
    %v1466 = vsel %vm1082, %v1456, %v1458
    %v1467 = vsel %vm1082, %v1458, %v1460
    %v1468 = vsel %vm1082, %v1460, %v1462
    %v1469 = vsel %vm1082, %v1462, %v1464
    %v1476 = vmax.f32 %v1441, %v1465
    %v1477 = vmax.f32 %v1442, %v1466
    %v1478 = vmax.f32 %v1443, %v1467
    %v1479 = vmax.f32 %v1444, %v1468
    %v1480 = vmax.f32 %v1445, %v1469
    %v1481 = vmax.f32 %v1446, %v1464
    %1486 = vrot.lane.b32.xlu0 %v1478, 23
    %v1487 = vpop.permute.xlu0 %1486
    %1488 = vrot.lane.b32.xlu0 %v1479, 23
    %v1489 = vpop.permute.xlu0 %1488
    %1490 = vrot.lane.b32.xlu0 %v1480, 23
    %v1491 = vpop.permute.xlu0 %1490
    %1492 = vrot.lane.b32.xlu0 %v1481, 23
    %v1493 = vpop.permute.xlu0 %1492
    %vm1494 = vcmask 187392
    %v1495 = vsel %vm1494, %v1487, %v1489
    %v1496 = vsel %vm1494, %v1489, %v1491
    %v1497 = vsel %vm1494, %v1491, %v1493
    %vm1500 = vcmask 531456
    %v1501 = vsel %vm1500, %v1478, 0
    %v1503 = vsel %vm1500, %v1497, 0
    %v1506 = vsel %vm752, %v345, 0
    %1508 = vmatprep.subr.mxu0 0.0
    %1509 = vmatpush1.msra.mxu0 %v305
    %1510 = vmatprep.subr.mxu0 0.0
    %1511 = vmatpush1.msra.mxu0 %v306
    %1512 = vmatprep.subr.mxu0 0.0
    %1513 = vmatpush1.msra.mxu0 %v307
    %1514 = vmatprep.subr.mxu0 0.0
    %1515 = vmatpush1.msra.mxu0 %v308
    %1516 = vmatprep.subr.mxu0 0.0
    %1517 = vmatpush1.msra.mxu0 %v309
    %1518 = vmatprep.subr.mxu0 0.0
    %1519 = vmatpush1.msra.mxu0 %v310
    %1520 = vmatprep.subr.mxu0 0.0
    %1521 = vmatpush1.msra.mxu0 %v311
    %1522 = vmatprep.subr.mxu0 0.0
    %1523 = vmatpush1.msra.mxu0 %v312
    %1524 = vmatprep.subr.mxu0 0.0
    %1525 = vmatpush1.msra.mxu0 %v313
    %1526 = vmatprep.subr.mxu0 0.0
    %1527 = vmatpush1.msra.mxu0 %v314
    %1528 = vmatprep.subr.mxu0 0.0
    %1529 = vmatpush1.msra.mxu0 %v315
    %1530 = vmatprep.subr.mxu0 0.0
    %1531 = vmatpush1.msra.mxu0 %v316
    %1532 = vmatprep.subr.mxu0 0.0
    %1533 = vmatpush1.msra.mxu0 %v317
    %1534 = vmatprep.subr.mxu0 0.0
    %1535 = vmatpush1.msra.mxu0 %v318
    %1536 = vmatprep.subr.mxu0 0.0
    %1537 = vmatpush1.msra.mxu0 %v319
    %1538 = vmatprep.subr.mxu0 0.0
    %1539 = vmatpush1.msra.mxu0 %v320
    %1540 = vmatprep.subr.mxu0 0.0
    %1541 = vmatpush1.msra.mxu0 %v321
    %1542 = vmatprep.subr.mxu0 0.0
    %1543 = vmatpush1.msra.mxu0 %v322
    %1544 = vmatprep.subr.mxu0 0.0
    %1545 = vmatpush1.msra.mxu0 %v323
    %1546 = vmatprep.subr.mxu0 0.0
    %1547 = vmatpush1.msra.mxu0 %v324
    %1548 = vmatprep.subr.mxu0 0.0
    %1549 = vmatpush1.msra.mxu0 %v325
    %1550 = vmatprep.subr.mxu0 0.0
    %1551 = vmatpush1.msra.mxu0 %v326
    %1552 = vmatprep.subr.mxu0 0.0
    %1553 = vmatpush1.msra.mxu0 %v327
    %1554 = vmatprep.subr.mxu0 0.0
    %1555 = vmatpush1.msra.mxu0 %v328
    %1556 = vmatprep.subr.mxu0 0.0
    %1557 = vmatpush1.msra.mxu0 %v329
    %1558 = vmatprep.subr.mxu0 0.0
    %1559 = vmatpush1.msra.mxu0 %v330
    %1560 = vmatprep.subr.mxu0 0.0
    %1561 = vmatpush1.msra.mxu0 %v331
    %1562 = vmatprep.subr.mxu0 0.0
    %1563 = vmatpush1.msra.mxu0 %v332
    %1564 = vmatprep.subr.mxu0 0.0
    %1565 = vmatpush1.msra.mxu0 %v333
    %1566 = vmatprep.subr.mxu0 0.0
    %1567 = vmatpush1.msra.mxu0 %v334
    %1568 = vmatprep.subr.mxu0 0.0
    %1569 = vmatpush1.msra.mxu0 %v335
    %1570 = vmatprep.subr.mxu0 0.0
    %1571 = vmatpush1.msra.mxu0 %v336
    %1572 = vmatprep.mubr.f32.mxu0 %v1477
    %1573 = vmatmul.mubr.f32.gmra.mrb[0].mxu0 %v1476
    %v1574 = vpop.f32.mrb[0].mxu0
    %v1575 = vadd.f32 0.0, %v1574
    %v1576 = vpop.f32.mrb[0].mxu0
    %1577 = vmatprep.mubr.f32.mxu0 %v1496
    %1578 = vmatmul.mubr.f32.gmra.mrb[0].mxu0 %v1495
    %v1579 = vpop.f32.mrb[0].mxu0
    %v1580 = vadd.f32 0.0, %v1579
    %v1581 = vpop.f32.mrb[0].mxu0
    %1582 = vdwg.mxu0
    %1583 = vmatprep.subr.mxu0 0.0
    %1584 = vmatpush1.msra.mxu0 %v337
    %1585 = vmatprep.subr.mxu0 0.0
    %1586 = vmatpush1.msra.mxu0 %v338
    %1587 = vmatprep.subr.mxu0 0.0
    %1588 = vmatpush1.msra.mxu0 %v339
    %1589 = vmatprep.subr.mxu0 0.0
    %1590 = vmatpush1.msra.mxu0 %v340
    %1591 = vmatprep.subr.mxu0 0.0
    %1592 = vmatpush1.msra.mxu0 %v341
    %1593 = vmatprep.subr.mxu0 0.0
    %1594 = vmatpush1.msra.mxu0 %v342
    %1595 = vmatprep.subr.mxu0 0.0
    %1596 = vmatpush1.msra.mxu0 %v343
    %1597 = vmatprep.subr.mxu0 0.0
    %1598 = vmatpush1.msra.mxu0 %v344
    %1599 = vmatprep.subr.mxu0 0.0
    %1600 = vmatpush1.msra.mxu0 %v1506
    %1601 = vmatprep.subr.mxu0 0.0
    %1602 = vmatpush1.msra.mxu0 0.0
    %1603 = vmatprep.subr.mxu0 0.0
    %1604 = vmatpush1.msra.mxu0 0.0
    %1605 = vmatprep.subr.mxu0 0.0
    %1606 = vmatpush1.msra.mxu0 0.0
    %1607 = vmatprep.subr.mxu0 0.0
    %1608 = vmatpush1.msra.mxu0 0.0
    %1609 = vmatprep.subr.mxu0 0.0
    %1610 = vmatpush1.msra.mxu0 0.0
    %1611 = vmatprep.subr.mxu0 0.0
    %1612 = vmatpush1.msra.mxu0 0.0
    %1613 = vmatprep.subr.mxu0 0.0
    %1614 = vmatpush1.msra.mxu0 0.0
    %1615 = vmatprep.subr.mxu0 0.0
    %1616 = vmatpush1.msra.mxu0 0.0
    %1617 = vmatprep.subr.mxu0 0.0
    %1618 = vmatpush1.msra.mxu0 0.0
    %1619 = vmatprep.subr.mxu0 0.0
    %1620 = vmatpush1.msra.mxu0 0.0
    %1621 = vmatprep.subr.mxu0 0.0
    %1622 = vmatpush1.msra.mxu0 0.0
    %1623 = vmatprep.subr.mxu0 0.0
    %1624 = vmatpush1.msra.mxu0 0.0
    %1625 = vmatprep.subr.mxu0 0.0
    %1626 = vmatpush1.msra.mxu0 0.0
    %1627 = vmatprep.subr.mxu0 0.0
    %1628 = vmatpush1.msra.mxu0 0.0
    %1629 = vmatprep.subr.mxu0 0.0
    %1630 = vmatpush1.msra.mxu0 0.0
    %1631 = vmatprep.subr.mxu0 0.0
    %1632 = vmatpush1.msra.mxu0 0.0
    %1633 = vmatprep.subr.mxu0 0.0
    %1634 = vmatpush1.msra.mxu0 0.0
    %1635 = vmatprep.subr.mxu0 0.0
    %1636 = vmatpush1.msra.mxu0 0.0
    %1637 = vmatprep.subr.mxu0 0.0
    %1638 = vmatpush1.msra.mxu0 0.0
    %1639 = vmatprep.subr.mxu0 0.0
    %1640 = vmatpush1.msra.mxu0 0.0
    %1641 = vmatprep.subr.mxu0 0.0
    %1642 = vmatpush1.msra.mxu0 0.0
    %1643 = vmatprep.subr.mxu0 0.0
    %1644 = vmatpush1.msra.mxu0 0.0
    %1645 = vmatprep.subr.mxu0 0.0
    %1646 = vmatpush1.msra.mxu0 0.0
    %1647 = vmatprep.mubr.f32.mxu0 0.0
    %1648 = vmatmul.mubr.f32.gmra.mrb[0].mxu0 %v1501
    %v1649 = vpop.f32.mrb[0].mxu0
    %v1650 = vadd.f32 %v1575, %v1649
    %v1651 = vpop.f32.mrb[0].mxu0
    %1652 = vmatprep.mubr.f32.mxu0 0.0
    %1653 = vmatmul.mubr.f32.gmra.mrb[0].mxu0 %v1503
    %v1654 = vpop.f32.mrb[0].mxu0
    %v1655 = vadd.f32 %v1580, %v1654
    %v1656 = vpop.f32.mrb[0].mxu0
    %1657 = vdwg.mxu0
    %1659 = vrot.lane.b32.xlu0 %v1655, 121
    %v1660 = vpop.permute.xlu0 %1659
    %vm1662 = vcmask 990208
    %v1663 = vsel %vm1662, %v1650, %v1660
    %v1664 = vld [vmem:[%s11] sm:$0xff]
    %v1665 = vld [vmem:[%s11 + $0x8] sm:$0xff]
    %1667 = vrot.lane.b32.xlu0 %v1663, 127
    %v1668 = vpop.permute.xlu0 %1667
    %1669 = vrot.lane.b32.xlu0 %v1660, 127
    %v1670 = vpop.permute.xlu0 %1669
    %v1671 = vsel %vm1082, %v1668, %v1670
    %1674 = vrot.lane.b32.xlu0 %v1663, 117
    %v1675 = vpop.permute.xlu0 %1674
    %1676 = vrot.lane.b32.xlu0 %v1660, 117
    %v1677 = vpop.permute.xlu0 %1676
    %vm1678 = vcmask 957440
    %v1679 = vsel %vm1678, %v1675, %v1677
    %1682 = vrot.lane.b32.xlu0 %v1663, 116
    %v1683 = vpop.permute.xlu0 %1682
    %1684 = vrot.lane.b32.xlu0 %v1660, 116
    %v1685 = vpop.permute.xlu0 %1684
    %vm1686 = vcmask 949248
    %v1687 = vsel %vm1686, %v1683, %v1685
    %v1690 = vld [vmem:[%s12] sm:$0xff]
    %v1691 = vld [vmem:[%s12 + $0x8] sm:$0xff]
    %1693 = vset.pattern.permute.xlu0 0
    %1694 = vperm.xlu0 %1693, %v1690
    %v1695 = vpop.permute.xlu0 %1694
    %1698 = vset.pattern.permute.xlu0 0
    %1699 = vperm.xlu0 %1698, %v1691
    %v1700 = vpop.permute.xlu0 %1699
    %vm1702 = vcmask 261120
    %v1704 = vsel %vm1702, %v1664, 0
    %v1707 = vsel %vm1702, %v1665, 0
    %1709 = vmatprep.subr.mxu0 %v1660
    %1710 = vmatpush1.msra.mxu0 %v1663
    %1711 = vmatprep.subr.mxu0 %v1670
    %1712 = vmatpush1.msra.mxu0 %v1671
    %1713 = vmatprep.subr.mxu0 %v1677
    %1714 = vmatpush1.msra.mxu0 %v1679
    %1715 = vmatprep.subr.mxu0 %v1685
    %1716 = vmatpush1.msra.mxu0 %v1687
    %1717 = vmatprep.subr.mxu0 0.0
    %1718 = vmatpush1.msra.mxu0 0.0
    %1719 = vmatprep.subr.mxu0 0.0
    %1720 = vmatpush1.msra.mxu0 0.0
    %1721 = vmatprep.subr.mxu0 0.0
    %1722 = vmatpush1.msra.mxu0 0.0
    %1723 = vmatprep.subr.mxu0 0.0
    %1724 = vmatpush1.msra.mxu0 0.0
    %1725 = vmatprep.subr.mxu0 0.0
    %1726 = vmatpush1.msra.mxu0 0.0
    %1727 = vmatprep.subr.mxu0 0.0
    %1728 = vmatpush1.msra.mxu0 0.0
    %1729 = vmatprep.subr.mxu0 0.0
    %1730 = vmatpush1.msra.mxu0 0.0
    %1731 = vmatprep.subr.mxu0 0.0
    %1732 = vmatpush1.msra.mxu0 0.0
    %1733 = vmatprep.subr.mxu0 0.0
    %1734 = vmatpush1.msra.mxu0 0.0
    %1735 = vmatprep.subr.mxu0 0.0
    %1736 = vmatpush1.msra.mxu0 0.0
    %1737 = vmatprep.subr.mxu0 0.0
    %1738 = vmatpush1.msra.mxu0 0.0
    %1739 = vmatprep.subr.mxu0 0.0
    %1740 = vmatpush1.msra.mxu0 0.0
    %1741 = vmatprep.subr.mxu0 0.0
    %1742 = vmatpush1.msra.mxu0 0.0
    %1743 = vmatprep.subr.mxu0 0.0
    %1744 = vmatpush1.msra.mxu0 0.0
    %1745 = vmatprep.subr.mxu0 0.0
    %1746 = vmatpush1.msra.mxu0 0.0
    %1747 = vmatprep.subr.mxu0 0.0
    %1748 = vmatpush1.msra.mxu0 0.0
    %1749 = vmatprep.subr.mxu0 0.0
    %1750 = vmatpush1.msra.mxu0 0.0
    %1751 = vmatprep.subr.mxu0 0.0
    %1752 = vmatpush1.msra.mxu0 0.0
    %1753 = vmatprep.subr.mxu0 0.0
    %1754 = vmatpush1.msra.mxu0 0.0
    %1755 = vmatprep.subr.mxu0 0.0
    %1756 = vmatpush1.msra.mxu0 0.0
    %1757 = vmatprep.subr.mxu0 0.0
    %1758 = vmatpush1.msra.mxu0 0.0
    %1759 = vmatprep.subr.mxu0 0.0
    %1760 = vmatpush1.msra.mxu0 0.0
    %1761 = vmatprep.subr.mxu0 0.0
    %1762 = vmatpush1.msra.mxu0 0.0
    %1763 = vmatprep.subr.mxu0 0.0
    %1764 = vmatpush1.msra.mxu0 0.0
    %1765 = vmatprep.subr.mxu0 0.0
    %1766 = vmatpush1.msra.mxu0 0.0
    %1767 = vmatprep.subr.mxu0 0.0
    %1768 = vmatpush1.msra.mxu0 0.0
    %1769 = vmatprep.subr.mxu0 0.0
    %1770 = vmatpush1.msra.mxu0 0.0
    %1771 = vmatprep.subr.mxu0 0.0
    %1772 = vmatpush1.msra.mxu0 0.0
    %1773 = vmatprep.mubr.f32.mxu0 0.0
    %1774 = vmatmul.mubr.f32.gmra.mrb[0].mxu0 %v1704
    %v1775 = vpop.f32.mrb[0].mxu0
    %v1776 = vadd.f32 %v1695, %v1775
    %v1777 = vpop.f32.mrb[0].mxu0
    %v1778 = vadd.f32 %v1695, %v1777
    %1779 = vmatprep.mubr.f32.mxu0 0.0
    %1780 = vmatmul.mubr.f32.gmra.mrb[0].mxu0 %v1707
    %v1781 = vpop.f32.mrb[0].mxu0
    %v1782 = vadd.f32 %v1700, %v1781
    %v1783 = vpop.f32.mrb[0].mxu0
    %v1784 = vadd.f32 %v1700, %v1783
    %1785 = vdwg.mxu0
    %vm1786 = vcmp.gt.f32.partialorder %v1776, 0.0
    %vm1787 = vcmp.gt.f32.partialorder %v1778, 0.0
    %vm1788 = vcmp.gt.f32.partialorder %v1782, 0.0
    %vm1789 = vcmp.gt.f32.partialorder %v1784, 0.0
    %v1790 = vmin.f32 %v1776, 0.0
    %v1791 = vmin.f32 %v1778, 0.0
    %v1792 = vmin.f32 %v1782, 0.0
    %v1793 = vmin.f32 %v1784, 0.0
    %v1794 = vmul.f32 %v1790, 1.442695
    %v1795 = vpow.pop %v1794
    %v1796 = vmul.f32 %v1791, 1.442695
    %v1797 = vpow.pop %v1796
    %v1798 = vmul.f32 %v1792, 1.442695
    %v1799 = vpow.pop %v1798
    %v1800 = vmul.f32 %v1793, 1.442695
    %v1801 = vpow.pop %v1800
    %v1802 = vsub.f32 %v1795, 1.0
    %v1803 = vsub.f32 %v1797, 1.0
    %v1804 = vsub.f32 %v1799, 1.0
    %v1805 = vsub.f32 %v1801, 1.0
    %v1806 = vsel %vm1786, %v1776, %v1802
    %v1807 = vsel %vm1787, %v1778, %v1803
    %v1808 = vsel %vm1788, %v1782, %v1804
    %v1809 = vsel %vm1789, %v1784, %v1805
    %1814 = vrot.lane.b32.xlu0 %v1806, 117
    %v1815 = vpop.permute.xlu0 %1814
    %1816 = vrot.lane.b32.xlu0 %v1807, 117
    %v1817 = vpop.permute.xlu0 %1816
    %1818 = vrot.lane.b32.xlu0 %v1808, 117
    %v1819 = vpop.permute.xlu0 %1818
    %1820 = vrot.lane.b32.xlu0 %v1809, 117
    %v1821 = vpop.permute.xlu0 %1820
    %v1822 = vsel %vm1678, %v1815, %v1817
    %v1823 = vsel %vm1678, %v1819, %v1821
    %v1828 = vadd.f32 %v1806, %v1822
    %v1829 = vadd.f32 %v1807, %v1817
    %v1830 = vadd.f32 %v1808, %v1823
    %v1831 = vadd.f32 %v1809, %v1821
    %1836 = vrot.lane.b32.xlu0 %v1828, 127
    %v1837 = vpop.permute.xlu0 %1836
    %1838 = vrot.lane.b32.xlu0 %v1829, 127
    %v1839 = vpop.permute.xlu0 %1838
    %1840 = vrot.lane.b32.xlu0 %v1830, 127
    %v1841 = vpop.permute.xlu0 %1840
    %1842 = vrot.lane.b32.xlu0 %v1831, 127
    %v1843 = vpop.permute.xlu0 %1842
    %v1844 = vsel %vm1082, %v1837, %v1839
    %v1845 = vsel %vm1082, %v1841, %v1843
    %v1850 = vadd.f32 %v1828, %v1844
    %v1851 = vadd.f32 %v1829, %v1839
    %v1852 = vadd.f32 %v1830, %v1845
    %v1853 = vadd.f32 %v1831, %v1843
    %1858 = vrot.lane.b32.xlu0 %v1850, 7
    %v1859 = vpop.permute.xlu0 %1858
    %1860 = vrot.lane.b32.xlu0 %v1851, 7
    %v1861 = vpop.permute.xlu0 %1860
    %1862 = vrot.lane.b32.xlu0 %v1852, 7
    %v1863 = vpop.permute.xlu0 %1862
    %1864 = vrot.lane.b32.xlu0 %v1853, 7
    %v1865 = vpop.permute.xlu0 %1864
    %vm1866 = vcmask 56320
    %v1867 = vsel %vm1866, %v1859, %v1861
    %v1868 = vsel %vm1866, %v1863, %v1865
    %vm1869 = vcmask 793600
    %v1870 = vsel %vm1869, %v1850, 0
    %v1872 = vsel %vm1869, %v1852, 0
    %v1874 = vsel %vm1869, %v1867, 0
    %v1876 = vsel %vm1869, %v1868, 0
    %v1879 = vsel %vm752, %v371, 0
    %1881 = vmatprep.subr.mxu0 0.0
    %1882 = vmatpush1.msra.mxu0 %v359
    %1883 = vmatprep.subr.mxu0 0.0
    %1884 = vmatpush1.msra.mxu0 %v360
    %1885 = vmatprep.subr.mxu0 0.0
    %1886 = vmatpush1.msra.mxu0 %v361
    %1887 = vmatprep.subr.mxu0 0.0
    %1888 = vmatpush1.msra.mxu0 %v362
    %1889 = vmatprep.subr.mxu0 0.0
    %1890 = vmatpush1.msra.mxu0 %v363
    %1891 = vmatprep.subr.mxu0 0.0
    %1892 = vmatpush1.msra.mxu0 %v364
    %1893 = vmatprep.subr.mxu0 0.0
    %1894 = vmatpush1.msra.mxu0 %v365
    %1895 = vmatprep.subr.mxu0 0.0
    %1896 = vmatpush1.msra.mxu0 %v366
    %1897 = vmatprep.subr.mxu0 0.0
    %1898 = vmatpush1.msra.mxu0 %v367
    %1899 = vmatprep.subr.mxu0 0.0
    %1900 = vmatpush1.msra.mxu0 %v368
    %1901 = vmatprep.subr.mxu0 0.0
    %1902 = vmatpush1.msra.mxu0 %v369
    %1903 = vmatprep.subr.mxu0 0.0
    %1904 = vmatpush1.msra.mxu0 %v370
    %1905 = vmatprep.subr.mxu0 0.0
    %1906 = vmatpush1.msra.mxu0 %v1879
    %1907 = vmatprep.subr.mxu0 0.0
    %1908 = vmatpush1.msra.mxu0 0.0
    %1909 = vmatprep.subr.mxu0 0.0
    %1910 = vmatpush1.msra.mxu0 0.0
    %1911 = vmatprep.subr.mxu0 0.0
    %1912 = vmatpush1.msra.mxu0 0.0
    %1913 = vmatprep.subr.mxu0 0.0
    %1914 = vmatpush1.msra.mxu0 0.0
    %1915 = vmatprep.subr.mxu0 0.0
    %1916 = vmatpush1.msra.mxu0 0.0
    %1917 = vmatprep.subr.mxu0 0.0
    %1918 = vmatpush1.msra.mxu0 0.0
    %1919 = vmatprep.subr.mxu0 0.0
    %1920 = vmatpush1.msra.mxu0 0.0
    %1921 = vmatprep.subr.mxu0 0.0
    %1922 = vmatpush1.msra.mxu0 0.0
    %1923 = vmatprep.subr.mxu0 0.0
    %1924 = vmatpush1.msra.mxu0 0.0
    %1925 = vmatprep.subr.mxu0 0.0
    %1926 = vmatpush1.msra.mxu0 0.0
    %1927 = vmatprep.subr.mxu0 0.0
    %1928 = vmatpush1.msra.mxu0 0.0
    %1929 = vmatprep.subr.mxu0 0.0
    %1930 = vmatpush1.msra.mxu0 0.0
    %1931 = vmatprep.subr.mxu0 0.0
    %1932 = vmatpush1.msra.mxu0 0.0
    %1933 = vmatprep.subr.mxu0 0.0
    %1934 = vmatpush1.msra.mxu0 0.0
    %1935 = vmatprep.subr.mxu0 0.0
    %1936 = vmatpush1.msra.mxu0 0.0
    %1937 = vmatprep.subr.mxu0 0.0
    %1938 = vmatpush1.msra.mxu0 0.0
    %1939 = vmatprep.subr.mxu0 0.0
    %1940 = vmatpush1.msra.mxu0 0.0
    %1941 = vmatprep.subr.mxu0 0.0
    %1942 = vmatpush1.msra.mxu0 0.0
    %1943 = vmatprep.subr.mxu0 0.0
    %1944 = vmatpush1.msra.mxu0 0.0
    %1945 = vmatprep.mubr.f32.mxu0 0.0
    %1946 = vmatmul.mubr.f32.gmra.mrb[0].mxu0 %v1870
    %v1947 = vpop.f32.mrb[0].mxu0
    %v1948 = vadd.f32 0.0, %v1947
    %v1949 = vpop.f32.mrb[0].mxu0
    %1950 = vmatprep.mubr.f32.mxu0 0.0
    %1951 = vmatmul.mubr.f32.gmra.mrb[0].mxu0 %v1872
    %v1952 = vpop.f32.mrb[0].mxu0
    %v1953 = vadd.f32 0.0, %v1952
    %v1954 = vpop.f32.mrb[0].mxu0
    %1955 = vmatprep.mubr.f32.mxu0 0.0
    %1956 = vmatmul.mubr.f32.gmra.mrb[0].mxu0 %v1874
    %v1957 = vpop.f32.mrb[0].mxu0
    %v1958 = vadd.f32 0.0, %v1957
    %v1959 = vpop.f32.mrb[0].mxu0
    %1960 = vmatprep.mubr.f32.mxu0 0.0
    %1961 = vmatmul.mubr.f32.gmra.mrb[0].mxu0 %v1876
    %v1962 = vpop.f32.mrb[0].mxu0
    %v1963 = vadd.f32 0.0, %v1962
    %v1964 = vpop.f32.mrb[0].mxu0
    %1965 = vdwg.mxu0
    %v1966 = vld [vmem:[%s13] sm:$0xff]
    %v1967 = vld [vmem:[%s13 + $0x8] sm:$0xff]
    %v1968 = vld [vmem:[%s13 + $0x10] sm:$0xff]
    %v1969 = vld [vmem:[%s13 + $0x18] sm:$0xff]
    %v1970 = vld [vmem:[%s13 + $0x20] sm:$0xff]
    %v1971 = vld [vmem:[%s13 + $0x28] sm:$0xff]
    %v1972 = vld [vmem:[%s13 + $0x30] sm:$0xff]
    %v1973 = vld [vmem:[%s13 + $0x38] sm:$0xff]
    %v1974 = vld [vmem:[%s13 + $0x40] sm:$0xff]
    %v1975 = vld [vmem:[%s13 + $0x48] sm:$0xff]
    %v1976 = vld [vmem:[%s13 + $0x50] sm:$0xff]
    %v1977 = vld [vmem:[%s13 + $0x58] sm:$0xff]
    %v1978 = vld [vmem:[%s13 + $0x60] sm:$0x1]
    %v1979 = vld [vmem:[%s13 + $0x68] sm:$0x1]
    %v1980 = vld [vmem:[%s13 + $0x70] sm:$0x1]
    %v1981 = vld [vmem:[%s13 + $0x78] sm:$0x1]
    %vm1982 = vcmask 203776
    %v1984 = vsel %vm1982, %v1948, 0
    %v1987 = vsel %vm1982, %v1953, 0
    %v1990 = vsel %vm1982, %v1958, 0
    %v1993 = vsel %vm1982, %v1963, 0
    %v1996 = vsel %vm752, %v1978, 0
    %v1999 = vsel %vm752, %v1979, 0
    %v2002 = vsel %vm752, %v1980, 0
    %v2005 = vsel %vm752, %v1981, 0
    %2007 = vmatprep.subr.mxu0 %v1967
    %2008 = vmatpush1.msra.mxu0 %v1966
    %2009 = vmatprep.subr.mxu0 %v1971
    %2010 = vmatpush1.msra.mxu0 %v1970
    %2011 = vmatprep.subr.mxu0 %v1975
    %2012 = vmatpush1.msra.mxu0 %v1974
    %2013 = vmatprep.subr.mxu0 %v1999
    %2014 = vmatpush1.msra.mxu0 %v1996
    %2015 = vmatprep.subr.mxu0 0.0
    %2016 = vmatpush1.msra.mxu0 0.0
    %2017 = vmatprep.subr.mxu0 0.0
    %2018 = vmatpush1.msra.mxu0 0.0
    %2019 = vmatprep.subr.mxu0 0.0
    %2020 = vmatpush1.msra.mxu0 0.0
    %2021 = vmatprep.subr.mxu0 0.0
    %2022 = vmatpush1.msra.mxu0 0.0
    %2023 = vmatprep.subr.mxu0 0.0
    %2024 = vmatpush1.msra.mxu0 0.0
    %2025 = vmatprep.subr.mxu0 0.0
    %2026 = vmatpush1.msra.mxu0 0.0
    %2027 = vmatprep.subr.mxu0 0.0
    %2028 = vmatpush1.msra.mxu0 0.0
    %2029 = vmatprep.subr.mxu0 0.0
    %2030 = vmatpush1.msra.mxu0 0.0
    %2031 = vmatprep.subr.mxu0 0.0
    %2032 = vmatpush1.msra.mxu0 0.0
    %2033 = vmatprep.subr.mxu0 0.0
    %2034 = vmatpush1.msra.mxu0 0.0
    %2035 = vmatprep.subr.mxu0 0.0
    %2036 = vmatpush1.msra.mxu0 0.0
    %2037 = vmatprep.subr.mxu0 0.0
    %2038 = vmatpush1.msra.mxu0 0.0
    %2039 = vmatprep.subr.mxu0 0.0
    %2040 = vmatpush1.msra.mxu0 0.0
    %2041 = vmatprep.subr.mxu0 0.0
    %2042 = vmatpush1.msra.mxu0 0.0
    %2043 = vmatprep.subr.mxu0 0.0
    %2044 = vmatpush1.msra.mxu0 0.0
    %2045 = vmatprep.subr.mxu0 0.0
    %2046 = vmatpush1.msra.mxu0 0.0
    %2047 = vmatprep.subr.mxu0 0.0
    %2048 = vmatpush1.msra.mxu0 0.0
    %2049 = vmatprep.subr.mxu0 0.0
    %2050 = vmatpush1.msra.mxu0 0.0
    %2051 = vmatprep.subr.mxu0 0.0
    %2052 = vmatpush1.msra.mxu0 0.0
    %2053 = vmatprep.subr.mxu0 0.0
    %2054 = vmatpush1.msra.mxu0 0.0
    %2055 = vmatprep.subr.mxu0 0.0
    %2056 = vmatpush1.msra.mxu0 0.0
    %2057 = vmatprep.subr.mxu0 0.0
    %2058 = vmatpush1.msra.mxu0 0.0
    %2059 = vmatprep.subr.mxu0 0.0
    %2060 = vmatpush1.msra.mxu0 0.0
    %2061 = vmatprep.subr.mxu0 0.0
    %2062 = vmatpush1.msra.mxu0 0.0
    %2063 = vmatprep.subr.mxu0 0.0
    %2064 = vmatpush1.msra.mxu0 0.0
    %2065 = vmatprep.subr.mxu0 0.0
    %2066 = vmatpush1.msra.mxu0 0.0
    %2067 = vmatprep.subr.mxu0 0.0
    %2068 = vmatpush1.msra.mxu0 0.0
    %2069 = vmatprep.subr.mxu0 0.0
    %2070 = vmatpush1.msra.mxu0 0.0
    %2071 = vmatprep.mubr.f32.mxu0 0.0
    %2072 = vmatmul.mubr.f32.gmra.mrb[0].mxu0 %v1984
    %v2073 = vpop.f32.mrb[0].mxu0
    %v2074 = vadd.f32 0.0, %v2073
    %v2075 = vpop.f32.mrb[0].mxu0
    %v2076 = vadd.f32 0.0, %v2075
    %2077 = vmatprep.mubr.f32.mxu0 0.0
    %2078 = vmatmul.mubr.f32.gmra.mrb[0].mxu0 %v1987
    %v2079 = vpop.f32.mrb[0].mxu0
    %v2080 = vadd.f32 0.0, %v2079
    %v2081 = vpop.f32.mrb[0].mxu0
    %v2082 = vadd.f32 0.0, %v2081
    %2083 = vmatprep.mubr.f32.mxu0 0.0
    %2084 = vmatmul.mubr.f32.gmra.mrb[0].mxu0 %v1990
    %v2085 = vpop.f32.mrb[0].mxu0
    %v2086 = vadd.f32 0.0, %v2085
    %v2087 = vpop.f32.mrb[0].mxu0
    %v2088 = vadd.f32 0.0, %v2087
    %2089 = vmatprep.mubr.f32.mxu0 0.0
    %2090 = vmatmul.mubr.f32.gmra.mrb[0].mxu0 %v1993
    %v2091 = vpop.f32.mrb[0].mxu0
    %v2092 = vadd.f32 0.0, %v2091
    %v2093 = vpop.f32.mrb[0].mxu0
    %v2094 = vadd.f32 0.0, %v2093
    %2095 = vdwg.mxu0
    %2096 = vmatprep.subr.mxu0 %v1969
    %2097 = vmatpush1.msra.mxu0 %v1968
    %2098 = vmatprep.subr.mxu0 %v1973
    %2099 = vmatpush1.msra.mxu0 %v1972
    %2100 = vmatprep.subr.mxu0 %v1977
    %2101 = vmatpush1.msra.mxu0 %v1976
    %2102 = vmatprep.subr.mxu0 %v2005
    %2103 = vmatpush1.msra.mxu0 %v2002
    %2104 = vmatprep.subr.mxu0 0.0
    %2105 = vmatpush1.msra.mxu0 0.0
    %2106 = vmatprep.subr.mxu0 0.0
    %2107 = vmatpush1.msra.mxu0 0.0
    %2108 = vmatprep.subr.mxu0 0.0
    %2109 = vmatpush1.msra.mxu0 0.0
    %2110 = vmatprep.subr.mxu0 0.0
    %2111 = vmatpush1.msra.mxu0 0.0
    %2112 = vmatprep.subr.mxu0 0.0
    %2113 = vmatpush1.msra.mxu0 0.0
    %2114 = vmatprep.subr.mxu0 0.0
    %2115 = vmatpush1.msra.mxu0 0.0
    %2116 = vmatprep.subr.mxu0 0.0
    %2117 = vmatpush1.msra.mxu0 0.0
    %2118 = vmatprep.subr.mxu0 0.0
    %2119 = vmatpush1.msra.mxu0 0.0
    %2120 = vmatprep.subr.mxu0 0.0
    %2121 = vmatpush1.msra.mxu0 0.0
    %2122 = vmatprep.subr.mxu0 0.0
    %2123 = vmatpush1.msra.mxu0 0.0
    %2124 = vmatprep.subr.mxu0 0.0
    %2125 = vmatpush1.msra.mxu0 0.0
    %2126 = vmatprep.subr.mxu0 0.0
    %2127 = vmatpush1.msra.mxu0 0.0
    %2128 = vmatprep.subr.mxu0 0.0
    %2129 = vmatpush1.msra.mxu0 0.0
    %2130 = vmatprep.subr.mxu0 0.0
    %2131 = vmatpush1.msra.mxu0 0.0
    %2132 = vmatprep.subr.mxu0 0.0
    %2133 = vmatpush1.msra.mxu0 0.0
    %2134 = vmatprep.subr.mxu0 0.0
    %2135 = vmatpush1.msra.mxu0 0.0
    %2136 = vmatprep.subr.mxu0 0.0
    %2137 = vmatpush1.msra.mxu0 0.0
    %2138 = vmatprep.subr.mxu0 0.0
    %2139 = vmatpush1.msra.mxu0 0.0
    %2140 = vmatprep.subr.mxu0 0.0
    %2141 = vmatpush1.msra.mxu0 0.0
    %2142 = vmatprep.subr.mxu0 0.0
    %2143 = vmatpush1.msra.mxu0 0.0
    %2144 = vmatprep.subr.mxu0 0.0
    %2145 = vmatpush1.msra.mxu0 0.0
    %2146 = vmatprep.subr.mxu0 0.0
    %2147 = vmatpush1.msra.mxu0 0.0
    %2148 = vmatprep.subr.mxu0 0.0
    %2149 = vmatpush1.msra.mxu0 0.0
    %2150 = vmatprep.subr.mxu0 0.0
    %2151 = vmatpush1.msra.mxu0 0.0
    %2152 = vmatprep.subr.mxu0 0.0
    %2153 = vmatpush1.msra.mxu0 0.0
    %2154 = vmatprep.subr.mxu0 0.0
    %2155 = vmatpush1.msra.mxu0 0.0
    %2156 = vmatprep.subr.mxu0 0.0
    %2157 = vmatpush1.msra.mxu0 0.0
    %2158 = vmatprep.subr.mxu0 0.0
    %2159 = vmatpush1.msra.mxu0 0.0
    %2160 = vmatprep.mubr.f32.mxu0 0.0
    %2161 = vmatmul.mubr.f32.gmra.mrb[0].mxu0 %v1984
    %v2162 = vpop.f32.mrb[0].mxu0
    %v2163 = vadd.f32 0.0, %v2162
    %v2164 = vpop.f32.mrb[0].mxu0
    %v2165 = vadd.f32 0.0, %v2164
    %2166 = vmatprep.mubr.f32.mxu0 0.0
    %2167 = vmatmul.mubr.f32.gmra.mrb[0].mxu0 %v1987
    %v2168 = vpop.f32.mrb[0].mxu0
    %v2169 = vadd.f32 0.0, %v2168
    %v2170 = vpop.f32.mrb[0].mxu0
    %v2171 = vadd.f32 0.0, %v2170
    %2172 = vmatprep.mubr.f32.mxu0 0.0
    %2173 = vmatmul.mubr.f32.gmra.mrb[0].mxu0 %v1990
    %v2174 = vpop.f32.mrb[0].mxu0
    %v2175 = vadd.f32 0.0, %v2174
    %v2176 = vpop.f32.mrb[0].mxu0
    %v2177 = vadd.f32 0.0, %v2176
    %2178 = vmatprep.mubr.f32.mxu0 0.0
    %2179 = vmatmul.mubr.f32.gmra.mrb[0].mxu0 %v1993
    %v2180 = vpop.f32.mrb[0].mxu0
    %v2181 = vadd.f32 0.0, %v2180
    %v2182 = vpop.f32.mrb[0].mxu0
    %v2183 = vadd.f32 0.0, %v2182
    %2184 = vdwg.mxu0
    %v2185 = vld [vmem:[%s14] sm:$0xff]
    %v2186 = vld [vmem:[%s14 + $0x8] sm:$0xff]
    %v2187 = vld [vmem:[%s14 + $0x10] sm:$0xff]
    %v2188 = vld [vmem:[%s14 + $0x18] sm:$0xff]
    %v2189 = vld [vmem:[%s14 + $0x20] sm:$0xff]
    %v2190 = vld [vmem:[%s14 + $0x28] sm:$0xff]
    %v2191 = vld [vmem:[%s14 + $0x30] sm:$0xff]
    %v2192 = vld [vmem:[%s14 + $0x38] sm:$0xff]
    %v2193 = vld [vmem:[%s14 + $0x40] sm:$0xff]
    %v2194 = vld [vmem:[%s14 + $0x48] sm:$0xff]
    %v2195 = vld [vmem:[%s14 + $0x50] sm:$0xff]
    %v2196 = vld [vmem:[%s14 + $0x58] sm:$0xff]
    %v2197 = vld [vmem:[%s14 + $0x60] sm:$0xff]
    %v2198 = vld [vmem:[%s14 + $0x68] sm:$0xff]
    %v2199 = vld [vmem:[%s14 + $0x70] sm:$0xff]
    %v2200 = vld [vmem:[%s14 + $0x78] sm:$0xff]
    %v2201 = vmul.f32 %v2074, %v2185
    %v2202 = vmul.f32 %v2076, %v2186
    %v2203 = vmul.f32 %v2163, %v2187
    %v2204 = vmul.f32 %v2165, %v2188
    %v2205 = vmul.f32 %v2080, %v2189
    %v2206 = vmul.f32 %v2082, %v2190
    %v2207 = vmul.f32 %v2169, %v2191
    %v2208 = vmul.f32 %v2171, %v2192
    %v2209 = vmul.f32 %v2086, %v2193
    %v2210 = vmul.f32 %v2088, %v2194
    %v2211 = vmul.f32 %v2175, %v2195
    %v2212 = vmul.f32 %v2177, %v2196
    %v2213 = vmul.f32 %v2092, %v2197
    %v2214 = vmul.f32 %v2094, %v2198
    %v2215 = vmul.f32 %v2181, %v2199
    %v2216 = vmul.f32 %v2183, %v2200
    %v2217 = vadd.f32 %v2201, %v2205
    %v2218 = vrot.slane %v2217, 4
    %v2219 = vadd.f32 %v2217, %v2218
    %v2220 = vrot.slane %v2219, 2
    %v2221 = vadd.f32 %v2219, %v2220
    %v2222 = vrot.slane %v2221, 1
    %v2223 = vadd.f32 %v2221, %v2222
    %v2224 = vadd.f32 %v2202, %v2206
    %v2225 = vrot.slane %v2224, 4
    %v2226 = vadd.f32 %v2224, %v2225
    %v2227 = vrot.slane %v2226, 2
    %v2228 = vadd.f32 %v2226, %v2227
    %v2229 = vrot.slane %v2228, 1
    %v2230 = vadd.f32 %v2228, %v2229
    %v2231 = vadd.f32 %v2203, %v2207
    %v2232 = vrot.slane %v2231, 4
    %v2233 = vadd.f32 %v2231, %v2232
    %v2234 = vrot.slane %v2233, 2
    %v2235 = vadd.f32 %v2233, %v2234
    %v2236 = vrot.slane %v2235, 1
    %v2237 = vadd.f32 %v2235, %v2236
    %v2238 = vadd.f32 %v2204, %v2208
    %v2239 = vrot.slane %v2238, 4
    %v2240 = vadd.f32 %v2238, %v2239
    %v2241 = vrot.slane %v2240, 2
    %v2242 = vadd.f32 %v2240, %v2241
    %v2243 = vrot.slane %v2242, 1
    %v2244 = vadd.f32 %v2242, %v2243
    %v2245 = vadd.f32 %v2209, %v2213
    %v2246 = vrot.slane %v2245, 4
    %v2247 = vadd.f32 %v2245, %v2246
    %v2248 = vrot.slane %v2247, 2
    %v2249 = vadd.f32 %v2247, %v2248
    %v2250 = vrot.slane %v2249, 1
    %v2251 = vadd.f32 %v2249, %v2250
    %v2252 = vadd.f32 %v2210, %v2214
    %v2253 = vrot.slane %v2252, 4
    %v2254 = vadd.f32 %v2252, %v2253
    %v2255 = vrot.slane %v2254, 2
    %v2256 = vadd.f32 %v2254, %v2255
    %v2257 = vrot.slane %v2256, 1
    %v2258 = vadd.f32 %v2256, %v2257
    %v2259 = vadd.f32 %v2211, %v2215
    %v2260 = vrot.slane %v2259, 4
    %v2261 = vadd.f32 %v2259, %v2260
    %v2262 = vrot.slane %v2261, 2
    %v2263 = vadd.f32 %v2261, %v2262
    %v2264 = vrot.slane %v2263, 1
    %v2265 = vadd.f32 %v2263, %v2264
    %v2266 = vadd.f32 %v2212, %v2216
    %v2267 = vrot.slane %v2266, 4
    %v2268 = vadd.f32 %v2266, %v2267
    %v2269 = vrot.slane %v2268, 2
    %v2270 = vadd.f32 %v2268, %v2269
    %v2271 = vrot.slane %v2270, 1
    %v2272 = vadd.f32 %v2270, %v2271
    %v2273 = vsel %vm752, %v2223, %v2251
    %v2274 = vsel %vm752, %v2230, %v2258
    %v2275 = vsel %vm752, %v2237, %v2265
    %v2276 = vsel %vm752, %v2244, %v2272
    %v2277 = vld [vmem:[%s15] sm:$0xff]
    %v2278 = vld [vmem:[%s15 + $0x8] sm:$0xff]
    %v2279 = vld [vmem:[%s15 + $0x10] sm:$0xff]
    %v2280 = vld [vmem:[%s15 + $0x18] sm:$0xff]
    %v2281 = vld [vmem:[%s15 + $0x20] sm:$0xff]
    %v2282 = vld [vmem:[%s15 + $0x28] sm:$0xff]
    %v2283 = vld [vmem:[%s15 + $0x30] sm:$0xff]
    %v2284 = vld [vmem:[%s15 + $0x38] sm:$0xff]
    %v2285 = vld [vmem:[%s15 + $0x40] sm:$0xff]
    %v2286 = vld [vmem:[%s15 + $0x48] sm:$0xff]
    %v2287 = vld [vmem:[%s15 + $0x50] sm:$0xff]
    %v2288 = vld [vmem:[%s15 + $0x58] sm:$0xff]
    %v2289 = vld [vmem:[%s15 + $0x60] sm:$0xff]
    %v2290 = vld [vmem:[%s15 + $0x68] sm:$0xff]
    %v2291 = vld [vmem:[%s15 + $0x70] sm:$0xff]
    %v2292 = vld [vmem:[%s15 + $0x78] sm:$0xff]
    %v2293 = vld [vmem:[%s15 + $0x80] sm:$0xff]
    %v2294 = vld [vmem:[%s15 + $0x88] sm:$0xff]
    %v2295 = vld [vmem:[%s15 + $0x90] sm:$0xff]
    %v2296 = vld [vmem:[%s15 + $0x98] sm:$0xff]
    %v2297 = vld [vmem:[%s15 + $0xa0] sm:$0xff]
    %v2298 = vld [vmem:[%s15 + $0xa8] sm:$0xff]
    %v2299 = vld [vmem:[%s15 + $0xb0] sm:$0xff]
    %v2300 = vld [vmem:[%s15 + $0xb8] sm:$0xff]
    %v2301 = vld [vmem:[%s15 + $0xc0] sm:$0xff]
    %v2302 = vld [vmem:[%s15 + $0xc8] sm:$0xff]
    %v2303 = vld [vmem:[%s15 + $0xd0] sm:$0xff]
    %v2304 = vld [vmem:[%s15 + $0xd8] sm:$0xff]
    %v2305 = vld [vmem:[%s15 + $0xe0] sm:$0xff]
    %v2306 = vld [vmem:[%s15 + $0xe8] sm:$0xff]
    %v2307 = vld [vmem:[%s15 + $0xf0] sm:$0xff]
    %v2308 = vld [vmem:[%s15 + $0xf8] sm:$0xff]
    %v2309 = vld [vmem:[%s15 + $0x100] sm:$0xff]
    %v2310 = vld [vmem:[%s15 + $0x108] sm:$0xff]
    %v2311 = vld [vmem:[%s15 + $0x110] sm:$0xff]
    %v2312 = vld [vmem:[%s15 + $0x118] sm:$0xff]
    %v2313 = vld [vmem:[%s15 + $0x120] sm:$0xff]
    %v2314 = vld [vmem:[%s15 + $0x128] sm:$0xff]
    %v2315 = vld [vmem:[%s15 + $0x130] sm:$0xff]
    %v2316 = vld [vmem:[%s15 + $0x138] sm:$0xff]
    %v2317 = vld [vmem:[%s15 + $0x140] sm:$0xff]
    %v2318 = vld [vmem:[%s15 + $0x148] sm:$0xff]
    %v2319 = vld [vmem:[%s15 + $0x150] sm:$0xff]
    %v2320 = vld [vmem:[%s15 + $0x158] sm:$0xff]
    %v2321 = vld [vmem:[%s15 + $0x160] sm:$0xff]
    %v2322 = vld [vmem:[%s15 + $0x168] sm:$0xff]
    %v2323 = vld [vmem:[%s15 + $0x170] sm:$0xff]
    %v2324 = vld [vmem:[%s15 + $0x178] sm:$0xff]
    %v2325 = vld [vmem:[%s15 + $0x180] sm:$0xff]
    %v2326 = vld [vmem:[%s15 + $0x188] sm:$0xff]
    %v2327 = vld [vmem:[%s15 + $0x190] sm:$0xff]
    %v2328 = vld [vmem:[%s15 + $0x198] sm:$0xff]
    %v2329 = vld [vmem:[%s15 + $0x1a0] sm:$0xff]
    %v2330 = vld [vmem:[%s15 + $0x1a8] sm:$0xff]
    %v2331 = vld [vmem:[%s15 + $0x1b0] sm:$0xff]
    %v2332 = vld [vmem:[%s15 + $0x1b8] sm:$0xff]
    %v2333 = vld [vmem:[%s15 + $0x1c0] sm:$0xff]
    %v2334 = vld [vmem:[%s15 + $0x1c8] sm:$0xff]
    %v2335 = vld [vmem:[%s15 + $0x1d0] sm:$0xff]
    %v2336 = vld [vmem:[%s15 + $0x1d8] sm:$0xff]
    %v2337 = vld [vmem:[%s15 + $0x1e0] sm:$0xff]
    %v2338 = vld [vmem:[%s15 + $0x1e8] sm:$0xff]
    %v2339 = vld [vmem:[%s15 + $0x1f0] sm:$0xff]
    %v2340 = vld [vmem:[%s15 + $0x1f8] sm:$0xff]
    %v2341 = vld [vmem:[%s16] sm:$0x1]
    %v2343 = vlaneseq
    %v2344 = vshrl.u32 %v2343, 7
    %v2345 = vsub.s32 0, %v2344
    %v2346 = vrot.slane %v2341, %v2345
    %2348 = vmatprep.subr.mxu0 0.0
    %2349 = vmatpush1.msra.mxu0 %v2277
    %2350 = vmatprep.subr.mxu0 0.0
    %2351 = vmatpush1.msra.mxu0 %v2278
    %2352 = vmatprep.subr.mxu0 0.0
    %2353 = vmatpush1.msra.mxu0 %v2279
    %2354 = vmatprep.subr.mxu0 0.0
    %2355 = vmatpush1.msra.mxu0 %v2280
    %2356 = vmatprep.subr.mxu0 0.0
    %2357 = vmatpush1.msra.mxu0 %v2281
    %2358 = vmatprep.subr.mxu0 0.0
    %2359 = vmatpush1.msra.mxu0 %v2282
    %2360 = vmatprep.subr.mxu0 0.0
    %2361 = vmatpush1.msra.mxu0 %v2283
    %2362 = vmatprep.subr.mxu0 0.0
    %2363 = vmatpush1.msra.mxu0 %v2284
    %2364 = vmatprep.subr.mxu0 0.0
    %2365 = vmatpush1.msra.mxu0 %v2285
    %2366 = vmatprep.subr.mxu0 0.0
    %2367 = vmatpush1.msra.mxu0 %v2286
    %2368 = vmatprep.subr.mxu0 0.0
    %2369 = vmatpush1.msra.mxu0 %v2287
    %2370 = vmatprep.subr.mxu0 0.0
    %2371 = vmatpush1.msra.mxu0 %v2288
    %2372 = vmatprep.subr.mxu0 0.0
    %2373 = vmatpush1.msra.mxu0 %v2289
    %2374 = vmatprep.subr.mxu0 0.0
    %2375 = vmatpush1.msra.mxu0 %v2290
    %2376 = vmatprep.subr.mxu0 0.0
    %2377 = vmatpush1.msra.mxu0 %v2291
    %2378 = vmatprep.subr.mxu0 0.0
    %2379 = vmatpush1.msra.mxu0 %v2292
    %2380 = vmatprep.subr.mxu0 0.0
    %2381 = vmatpush1.msra.mxu0 %v2293
    %2382 = vmatprep.subr.mxu0 0.0
    %2383 = vmatpush1.msra.mxu0 %v2294
    %2384 = vmatprep.subr.mxu0 0.0
    %2385 = vmatpush1.msra.mxu0 %v2295
    %2386 = vmatprep.subr.mxu0 0.0
    %2387 = vmatpush1.msra.mxu0 %v2296
    %2388 = vmatprep.subr.mxu0 0.0
    %2389 = vmatpush1.msra.mxu0 %v2297
    %2390 = vmatprep.subr.mxu0 0.0
    %2391 = vmatpush1.msra.mxu0 %v2298
    %2392 = vmatprep.subr.mxu0 0.0
    %2393 = vmatpush1.msra.mxu0 %v2299
    %2394 = vmatprep.subr.mxu0 0.0
    %2395 = vmatpush1.msra.mxu0 %v2300
    %2396 = vmatprep.subr.mxu0 0.0
    %2397 = vmatpush1.msra.mxu0 %v2301
    %2398 = vmatprep.subr.mxu0 0.0
    %2399 = vmatpush1.msra.mxu0 %v2302
    %2400 = vmatprep.subr.mxu0 0.0
    %2401 = vmatpush1.msra.mxu0 %v2303
    %2402 = vmatprep.subr.mxu0 0.0
    %2403 = vmatpush1.msra.mxu0 %v2304
    %2404 = vmatprep.subr.mxu0 0.0
    %2405 = vmatpush1.msra.mxu0 %v2305
    %2406 = vmatprep.subr.mxu0 0.0
    %2407 = vmatpush1.msra.mxu0 %v2306
    %2408 = vmatprep.subr.mxu0 0.0
    %2409 = vmatpush1.msra.mxu0 %v2307
    %2410 = vmatprep.subr.mxu0 0.0
    %2411 = vmatpush1.msra.mxu0 %v2308
    %2412 = vmatprep.mubr.f32.mxu0 %v2274
    %2413 = vmatmul.mubr.f32.gmra.mrb[0].mxu0 %v2273
    %v2414 = vpop.f32.mrb[0].mxu0
    %v2415 = vadd.f32 %v2346, %v2414
    %v2416 = vpop.f32.mrb[0].mxu0
    %2417 = vdwg.mxu0
    %2418 = vmatprep.subr.mxu0 0.0
    %2419 = vmatpush1.msra.mxu0 %v2309
    %2420 = vmatprep.subr.mxu0 0.0
    %2421 = vmatpush1.msra.mxu0 %v2310
    %2422 = vmatprep.subr.mxu0 0.0
    %2423 = vmatpush1.msra.mxu0 %v2311
    %2424 = vmatprep.subr.mxu0 0.0
    %2425 = vmatpush1.msra.mxu0 %v2312
    %2426 = vmatprep.subr.mxu0 0.0
    %2427 = vmatpush1.msra.mxu0 %v2313
    %2428 = vmatprep.subr.mxu0 0.0
    %2429 = vmatpush1.msra.mxu0 %v2314
    %2430 = vmatprep.subr.mxu0 0.0
    %2431 = vmatpush1.msra.mxu0 %v2315
    %2432 = vmatprep.subr.mxu0 0.0
    %2433 = vmatpush1.msra.mxu0 %v2316
    %2434 = vmatprep.subr.mxu0 0.0
    %2435 = vmatpush1.msra.mxu0 %v2317
    %2436 = vmatprep.subr.mxu0 0.0
    %2437 = vmatpush1.msra.mxu0 %v2318
    %2438 = vmatprep.subr.mxu0 0.0
    %2439 = vmatpush1.msra.mxu0 %v2319
    %2440 = vmatprep.subr.mxu0 0.0
    %2441 = vmatpush1.msra.mxu0 %v2320
    %2442 = vmatprep.subr.mxu0 0.0
    %2443 = vmatpush1.msra.mxu0 %v2321
    %2444 = vmatprep.subr.mxu0 0.0
    %2445 = vmatpush1.msra.mxu0 %v2322
    %2446 = vmatprep.subr.mxu0 0.0
    %2447 = vmatpush1.msra.mxu0 %v2323
    %2448 = vmatprep.subr.mxu0 0.0
    %2449 = vmatpush1.msra.mxu0 %v2324
    %2450 = vmatprep.subr.mxu0 0.0
    %2451 = vmatpush1.msra.mxu0 %v2325
    %2452 = vmatprep.subr.mxu0 0.0
    %2453 = vmatpush1.msra.mxu0 %v2326
    %2454 = vmatprep.subr.mxu0 0.0
    %2455 = vmatpush1.msra.mxu0 %v2327
    %2456 = vmatprep.subr.mxu0 0.0
    %2457 = vmatpush1.msra.mxu0 %v2328
    %2458 = vmatprep.subr.mxu0 0.0
    %2459 = vmatpush1.msra.mxu0 %v2329
    %2460 = vmatprep.subr.mxu0 0.0
    %2461 = vmatpush1.msra.mxu0 %v2330
    %2462 = vmatprep.subr.mxu0 0.0
    %2463 = vmatpush1.msra.mxu0 %v2331
    %2464 = vmatprep.subr.mxu0 0.0
    %2465 = vmatpush1.msra.mxu0 %v2332
    %2466 = vmatprep.subr.mxu0 0.0
    %2467 = vmatpush1.msra.mxu0 %v2333
    %2468 = vmatprep.subr.mxu0 0.0
    %2469 = vmatpush1.msra.mxu0 %v2334
    %2470 = vmatprep.subr.mxu0 0.0
    %2471 = vmatpush1.msra.mxu0 %v2335
    %2472 = vmatprep.subr.mxu0 0.0
    %2473 = vmatpush1.msra.mxu0 %v2336
    %2474 = vmatprep.subr.mxu0 0.0
    %2475 = vmatpush1.msra.mxu0 %v2337
    %2476 = vmatprep.subr.mxu0 0.0
    %2477 = vmatpush1.msra.mxu0 %v2338
    %2478 = vmatprep.subr.mxu0 0.0
    %2479 = vmatpush1.msra.mxu0 %v2339
    %2480 = vmatprep.subr.mxu0 0.0
    %2481 = vmatpush1.msra.mxu0 %v2340
    %2482 = vmatprep.mubr.f32.mxu0 %v2276
    %2483 = vmatmul.mubr.f32.gmra.mrb[0].mxu0 %v2275
    %v2484 = vpop.f32.mrb[0].mxu0
    %v2485 = vadd.f32 %v2415, %v2484
    %v2486 = vpop.f32.mrb[0].mxu0
    %2487 = vdwg.mxu0
    %v2488 = vmax.f32 %v2485, 0.0
    %v2489 = vld [vmem:[%s17] sm:$0xff]
    %v2490 = vld [vmem:[%s17 + $0x8] sm:$0xff]
    %v2491 = vld [vmem:[%s17 + $0x10] sm:$0xff]
    %v2492 = vld [vmem:[%s17 + $0x18] sm:$0xff]
    %v2493 = vld [vmem:[%s18] sm:$0x1]
    %v2495 = vlaneseq
    %v2496 = vshrl.u32 %v2495, 7
    %v2497 = vsub.s32 0, %v2496
    %v2498 = vrot.slane %v2493, %v2497
    %v2501 = vsel %vm1702, %v2488, 0
    %2503 = vmatprep.subr.mxu0 0.0
    %2504 = vmatpush1.msra.mxu0 %v2489
    %2505 = vmatprep.subr.mxu0 0.0
    %2506 = vmatpush1.msra.mxu0 %v2490
    %2507 = vmatprep.subr.mxu0 0.0
    %2508 = vmatpush1.msra.mxu0 %v2491
    %2509 = vmatprep.subr.mxu0 0.0
    %2510 = vmatpush1.msra.mxu0 %v2492
    %2511 = vmatprep.subr.mxu0 0.0
    %2512 = vmatpush1.msra.mxu0 0.0
    %2513 = vmatprep.subr.mxu0 0.0
    %2514 = vmatpush1.msra.mxu0 0.0
    %2515 = vmatprep.subr.mxu0 0.0
    %2516 = vmatpush1.msra.mxu0 0.0
    %2517 = vmatprep.subr.mxu0 0.0
    %2518 = vmatpush1.msra.mxu0 0.0
    %2519 = vmatprep.subr.mxu0 0.0
    %2520 = vmatpush1.msra.mxu0 0.0
    %2521 = vmatprep.subr.mxu0 0.0
    %2522 = vmatpush1.msra.mxu0 0.0
    %2523 = vmatprep.subr.mxu0 0.0
    %2524 = vmatpush1.msra.mxu0 0.0
    %2525 = vmatprep.subr.mxu0 0.0
    %2526 = vmatpush1.msra.mxu0 0.0
    %2527 = vmatprep.subr.mxu0 0.0
    %2528 = vmatpush1.msra.mxu0 0.0
    %2529 = vmatprep.subr.mxu0 0.0
    %2530 = vmatpush1.msra.mxu0 0.0
    %2531 = vmatprep.subr.mxu0 0.0
    %2532 = vmatpush1.msra.mxu0 0.0
    %2533 = vmatprep.subr.mxu0 0.0
    %2534 = vmatpush1.msra.mxu0 0.0
    %2535 = vmatprep.subr.mxu0 0.0
    %2536 = vmatpush1.msra.mxu0 0.0
    %2537 = vmatprep.subr.mxu0 0.0
    %2538 = vmatpush1.msra.mxu0 0.0
    %2539 = vmatprep.subr.mxu0 0.0
    %2540 = vmatpush1.msra.mxu0 0.0
    %2541 = vmatprep.subr.mxu0 0.0
    %2542 = vmatpush1.msra.mxu0 0.0
    %2543 = vmatprep.subr.mxu0 0.0
    %2544 = vmatpush1.msra.mxu0 0.0
    %2545 = vmatprep.subr.mxu0 0.0
    %2546 = vmatpush1.msra.mxu0 0.0
    %2547 = vmatprep.subr.mxu0 0.0
    %2548 = vmatpush1.msra.mxu0 0.0
    %2549 = vmatprep.subr.mxu0 0.0
    %2550 = vmatpush1.msra.mxu0 0.0
    %2551 = vmatprep.subr.mxu0 0.0
    %2552 = vmatpush1.msra.mxu0 0.0
    %2553 = vmatprep.subr.mxu0 0.0
    %2554 = vmatpush1.msra.mxu0 0.0
    %2555 = vmatprep.subr.mxu0 0.0
    %2556 = vmatpush1.msra.mxu0 0.0
    %2557 = vmatprep.subr.mxu0 0.0
    %2558 = vmatpush1.msra.mxu0 0.0
    %2559 = vmatprep.subr.mxu0 0.0
    %2560 = vmatpush1.msra.mxu0 0.0
    %2561 = vmatprep.subr.mxu0 0.0
    %2562 = vmatpush1.msra.mxu0 0.0
    %2563 = vmatprep.subr.mxu0 0.0
    %2564 = vmatpush1.msra.mxu0 0.0
    %2565 = vmatprep.subr.mxu0 0.0
    %2566 = vmatpush1.msra.mxu0 0.0
    %2567 = vmatprep.mubr.f32.mxu0 0.0
    %2568 = vmatmul.mubr.f32.gmra.mrb[0].mxu0 %v2501
    %v2569 = vpop.f32.mrb[0].mxu0
    %v2570 = vadd.f32 %v2498, %v2569
    %v2571 = vpop.f32.mrb[0].mxu0
    %2572 = vdwg.mxu0
    %v2573 = vmax.f32 %v2570, 0.0
    %v2574 = vld [vmem:[%s19] sm:$0xff]
    %v2575 = vld [vmem:[%s19 + $0x8] sm:$0xff]
    %v2576 = vld [vmem:[%s19 + $0x10] sm:$0xff]
    %v2577 = vld [vmem:[%s19 + $0x18] sm:$0xff]
    %v2578 = vld [vmem:[%s20] sm:$0x1]
    %v2580 = vlaneseq
    %v2581 = vshrl.u32 %v2580, 7
    %v2582 = vsub.s32 0, %v2581
    %v2583 = vrot.slane %v2578, %v2582
    %v2586 = vsel %vm1702, %v2573, 0
    %2588 = vmatprep.subr.mxu0 0.0
    %2589 = vmatpush1.msra.mxu0 %v2574
    %2590 = vmatprep.subr.mxu0 0.0
    %2591 = vmatpush1.msra.mxu0 %v2575
    %2592 = vmatprep.subr.mxu0 0.0
    %2593 = vmatpush1.msra.mxu0 %v2576
    %2594 = vmatprep.subr.mxu0 0.0
    %2595 = vmatpush1.msra.mxu0 %v2577
    %2596 = vmatprep.subr.mxu0 0.0
    %2597 = vmatpush1.msra.mxu0 0.0
    %2598 = vmatprep.subr.mxu0 0.0
    %2599 = vmatpush1.msra.mxu0 0.0
    %2600 = vmatprep.subr.mxu0 0.0
    %2601 = vmatpush1.msra.mxu0 0.0
    %2602 = vmatprep.subr.mxu0 0.0
    %2603 = vmatpush1.msra.mxu0 0.0
    %2604 = vmatprep.subr.mxu0 0.0
    %2605 = vmatpush1.msra.mxu0 0.0
    %2606 = vmatprep.subr.mxu0 0.0
    %2607 = vmatpush1.msra.mxu0 0.0
    %2608 = vmatprep.subr.mxu0 0.0
    %2609 = vmatpush1.msra.mxu0 0.0
    %2610 = vmatprep.subr.mxu0 0.0
    %2611 = vmatpush1.msra.mxu0 0.0
    %2612 = vmatprep.subr.mxu0 0.0
    %2613 = vmatpush1.msra.mxu0 0.0
    %2614 = vmatprep.subr.mxu0 0.0
    %2615 = vmatpush1.msra.mxu0 0.0
    %2616 = vmatprep.subr.mxu0 0.0
    %2617 = vmatpush1.msra.mxu0 0.0
    %2618 = vmatprep.subr.mxu0 0.0
    %2619 = vmatpush1.msra.mxu0 0.0
    %2620 = vmatprep.subr.mxu0 0.0
    %2621 = vmatpush1.msra.mxu0 0.0
    %2622 = vmatprep.subr.mxu0 0.0
    %2623 = vmatpush1.msra.mxu0 0.0
    %2624 = vmatprep.subr.mxu0 0.0
    %2625 = vmatpush1.msra.mxu0 0.0
    %2626 = vmatprep.subr.mxu0 0.0
    %2627 = vmatpush1.msra.mxu0 0.0
    %2628 = vmatprep.subr.mxu0 0.0
    %2629 = vmatpush1.msra.mxu0 0.0
    %2630 = vmatprep.subr.mxu0 0.0
    %2631 = vmatpush1.msra.mxu0 0.0
    %2632 = vmatprep.subr.mxu0 0.0
    %2633 = vmatpush1.msra.mxu0 0.0
    %2634 = vmatprep.subr.mxu0 0.0
    %2635 = vmatpush1.msra.mxu0 0.0
    %2636 = vmatprep.subr.mxu0 0.0
    %2637 = vmatpush1.msra.mxu0 0.0
    %2638 = vmatprep.subr.mxu0 0.0
    %2639 = vmatpush1.msra.mxu0 0.0
    %2640 = vmatprep.subr.mxu0 0.0
    %2641 = vmatpush1.msra.mxu0 0.0
    %2642 = vmatprep.subr.mxu0 0.0
    %2643 = vmatpush1.msra.mxu0 0.0
    %2644 = vmatprep.subr.mxu0 0.0
    %2645 = vmatpush1.msra.mxu0 0.0
    %2646 = vmatprep.subr.mxu0 0.0
    %2647 = vmatpush1.msra.mxu0 0.0
    %2648 = vmatprep.subr.mxu0 0.0
    %2649 = vmatpush1.msra.mxu0 0.0
    %2650 = vmatprep.subr.mxu0 0.0
    %2651 = vmatpush1.msra.mxu0 0.0
    %2652 = vmatprep.mubr.f32.mxu0 0.0
    %2653 = vmatmul.mubr.f32.gmra.mrb[0].mxu0 %v2586
    %v2654 = vpop.f32.mrb[0].mxu0
    %v2655 = vadd.f32 %v2583, %v2654
    %v2656 = vpop.f32.mrb[0].mxu0
    %2657 = vdwg.mxu0
    %vm2658 = vcmask 58368
    %v2659 = vsel %vm2658, %v2655, -inf
    %2660 = vmax.xlane.f32.xlu0 %v2659
    %v2661 = vpop.xlane.xlu0 %2660
    %v2662 = vsub.f32 %v2655, %v2661
    %v2663 = vmul.f32 %v2662, 1.442695
    %v2664 = vpow.pop %v2663
    %v2665 = vsel %vm2658, %v2664, 0.0
    %2666 = vadd.xlane.f32.xlu0 %v2665
    %v2667 = vpop.xlane.xlu0 %2666
    %v2668 = vrcp.pop %v2667
    %v2669 = vmul.f32 %v2664, %v2668
    %2670 = vst.msk [vmem:[#allocation2] sm:$0x3] %vm2658, %v2669
    // Predicated region
    $region86: #{charmanet_forward.1} parent=1 // pred_check
      _
    $region87: #{charmanet_forward.1} parent=1 // pred_check_branch
      %2672 = sbr.rel (0) target = $region89
    $region88: #{charmanet_forward.1} parent=1 // pred_region
      %s2674 = ssub.s32 32, 32
      %2675 = vsyncadd [#allocation3], %s2674
      %s2677 = sshll.u32 [#allocation2], 4
      %s2678 = int_to_ptr.vmem [resolvable:$true] %s2677
      %2680 = dma.vmem_to_hbm [thread:$0]  %s2678, 32, %s21, [#allocation3]
    $region89: #{charmanet_forward.1} parent=1 // pred_fallthru
      _
    // Predicated region
    $region90: #{charmanet_forward.1} parent=1 // pred_check
      _
    $region91: #{charmanet_forward.1} parent=1 // pred_check_branch
      %2682 = sbr.rel (0) target = $region93
    $region92: #{charmanet_forward.1} parent=1 // pred_region
      %2683 = dma.done [#allocation3], 32
    $region93: #{charmanet_forward.1} parent=1 // pred_fallthru
      _
    %2684 = vsyncpa [#allocation3], 1

</llo_original>
